<compile_context>
chip_gen: v5e
topology: v5e:2x2
jax: 0.10.0
libtpu: 0.0.40
codegen_flags: <defaults>
</compile_context>

<pallas_src>
import jax
import jax.numpy as jnp
from jax.experimental import pallas as pl
from jax.experimental.pallas import tpu as pltpu


def _round_up(n, m):
    return ((n + m - 1) // m) * m


def _vmem_capacity_bytes():
    try:
        return int(pltpu.get_tpu_info().vmem_capacity_bytes)
    except Exception:
        return 64 << 20  # conservative fallback: v7x per-TensorCore VMEM


def _mlp_kernel(x_ref, w1_ref, b1_ref, w2_ref, b2_ref, w3_ref, b3_ref,
                o_ref, acc_ref):
    """Grid = (batch_tiles, k_tiles).  Layer-1 K partials accumulate into
    acc_ref (f32); on the final K step layers 2/3 run and lane-dense logits
    are stored."""
    k = pl.program_id(1)

    @pl.when(k == 0)
    def _():
        acc_ref[...] = jnp.zeros_like(acc_ref)

    # Layer 1 partial: (TB, TK)bf16 @ (TK, 256)bf16 -> f32 accumulate on MXU.
    acc_ref[...] += jnp.dot(x_ref[...].astype(jnp.bfloat16), w1_ref[...],
                            preferred_element_type=jnp.float32)

    @pl.when(k == pl.num_programs(1) - 1)
    def _():
        h1 = jnp.maximum(acc_ref[...] + b1_ref[...], 0.0)
        h2 = jnp.dot(h1.astype(jnp.bfloat16), w2_ref[...],
                     preferred_element_type=jnp.float32)
        h2 = jnp.maximum(h2 + b2_ref[...], 0.0)
        logits = jnp.dot(h2.astype(jnp.bfloat16), w3_ref[...],
                         preferred_element_type=jnp.float32)
        o_ref[...] = (logits + b3_ref[...]).astype(o_ref.dtype)


def prepare_params(params):
    """One-time weight prep (hoisted out of the per-call path): bf16 weights,
    f32 row-vector biases, label dim zero-padded to a multiple of 128 (exact)."""
    w1, b1 = params["w1"], params["b1"]
    w2, b2 = params["w2"], params["b2"]
    w3, b3 = params["w3"], params["b3"]
    H1, H2 = w1.shape[1], w2.shape[1]
    L = w3.shape[1]
    Lp = _round_up(L, 128)
    w3_p = jnp.zeros((H2, Lp), jnp.bfloat16).at[:, :L].set(w3.astype(jnp.bfloat16))
    b3_p = jnp.zeros((1, Lp), jnp.float32).at[0, :L].set(b3.astype(jnp.float32))
    return {
        "w1": w1.astype(jnp.bfloat16),
        "b1": b1.reshape(1, H1).astype(jnp.float32),
        "w2": w2.astype(jnp.bfloat16),
        "b2": b2.reshape(1, H2).astype(jnp.float32),
        "w3": w3_p,
        "b3": b3_p,
        "labels_num": L,
    }


def label_predictor_forward(x, params, *, tb=512, out_dtype=jnp.float32,
                            max_w1_tile_bytes=None):
    """x: (B, D) flattened features (any float dtype; cast to bf16 in-kernel).
    params: raw f32 dict {w1,b1,w2,b2,w3,b3} or output of prepare_params().
    Returns (B, labels_num) logits in out_dtype."""
    if "labels_num" not in params:
        params = prepare_params(params)  # slow path: per-call prep (avoid)
    w1, b1 = params["w1"], params["b1"]
    w2, b2 = params["w2"], params["b2"]
    w3, b3 = params["w3"], params["b3"]
    L = params["labels_num"]

    B, D = x.shape
    H1, H2 = w1.shape[1], w2.shape[1]
    Lp = w3.shape[1]
    assert H1 % 128 == 0 and H2 % 128 == 0, "hidden dims must be lane-aligned"
    x_bytes = x.dtype.itemsize
    out_bytes = jnp.dtype(out_dtype).itemsize

    # ---- generation-aware VMEM budget -------------------------------------
    capacity = _vmem_capacity_bytes()
    vmem_cap = max(min(capacity * 3 // 4, capacity - (16 << 20)), 16 << 20)

    # ---- K tiling over D (layer-1 reduction) ------------------------------
    # Keep w1's VMEM footprint within ~1/3 of the budget; otherwise stream it
    # over a lane-aligned K grid axis (last, "arbitrary").
    w1_budget = int(max_w1_tile_bytes or vmem_cap // 3)
    if D * H1 * 2 <= w1_budget:
        TK, Dp, nk = D, D, 1                       # resident w1, no D padding
    else:
        TK = max(128, ((w1_budget // 2) // (H1 * 2)) // 128 * 128)
        TK = min(TK, _round_up(D, 128))
        Dp = _round_up(D, TK)
        nk = Dp // TK

    # ---- batch tiling ------------------------------------------------------
    def vmem_need(tb_rows):
        w1_bufs = 1 if nk == 1 else 2
        return (2 * tb_rows * TK * x_bytes          # x tiles (double-buffered)
                + 2 * tb_rows * Lp * out_bytes      # out tiles (double-buffered)
                + tb_rows * H1 * 4                  # f32 accumulator scratch
                + w1_bufs * TK * H1 * 2             # w1
                + (H1 * H2 + H2 * Lp) * 2           # w2, w3 (resident)
                + (H1 + H2 + Lp) * 4)               # biases

    TB = _round_up(max(tb, 16), 16)
    dma_rows = _round_up(max((2 << 20) // max(TK * x_bytes, 1), 16), 16)
    TB = max(TB, min(dma_rows, 1024))               # target ~2 MiB x-tile DMA
    TB = min(TB, _round_up(B, 16))
    if B >= 32:                                     # >=2 grid steps (megacore)
        TB = min(TB, _round_up(pl.cdiv(B, 2), 16))
    while TB > 16 and vmem_need(TB) > vmem_cap:
        TB = _round_up(TB // 2, 16)
    nb = pl.cdiv(B, TB)
    grid = (nb, nk)

    vmem_limit = int(min(max(vmem_need(TB) * 5 // 4 + (2 << 20), 16 << 20),
                         vmem_cap))

    # ---- pad D only when streaming w1 over a non-dividing K tile ----------
    x_in, w1_in = x, w1
    if Dp != D:
        x_in = jnp.zeros((B, Dp), x.dtype).at[:, :D].set(x)
        w1_in = jnp.zeros((Dp, H1), jnp.bfloat16).at[:D, :].set(w1)

    cost = pl.CostEstimate(
        flops=2 * B * (D * H1 + H1 * H2 + H2 * L),
        transcendentals=0,
        bytes_accessed=(B * Dp * x_bytes
                        + (nb if nk > 1 else 1) * Dp * H1 * 2
                        + (H1 * H2 + H2 * Lp) * 2
                        + B * Lp * out_bytes),
    )

    def _call(single_buffer_resident):
        def resident(shape):
            if single_buffer_resident:
                return pl.BlockSpec(shape, lambda i, k: (0, 0),
                                    pipeline_mode=pl.Buffered(1))
            return pl.BlockSpec(shape, lambda i, k: (0, 0))

        w1_spec = (resident((TK, H1)) if nk == 1
                   else pl.BlockSpec((TK, H1), lambda i, k: (k, 0)))
        in_specs = [
            pl.BlockSpec((TB, TK), lambda i, k: (i, k)),   # x: batch x K tiles
            w1_spec,                                       # w1
            resident((1, H1)),                             # b1
            resident((H1, H2)),                            # w2
            resident((1, H2)),                             # b2
            resident((H2, Lp)),                            # w3
            resident((1, Lp)),                             # b3
        ]
        return pl.pallas_call(
            _mlp_kernel,
            out_shape=jax.ShapeDtypeStruct((B, Lp), out_dtype),
            grid_spec=pltpu.PrefetchScalarGridSpec(
                num_scalar_prefetch=0,
                grid=grid,
                in_specs=in_specs,
                out_specs=pl.BlockSpec((TB, Lp), lambda i, k: (i, 0)),
                scratch_shapes=[pltpu.VMEM((TB, H1), jnp.float32)],
            ),
            compiler_params=pltpu.CompilerParams(
                dimension_semantics=("parallel", "arbitrary"),
                vmem_limit_bytes=vmem_limit,
            ),
            cost_estimate=cost,
        )(x_in, w1_in, b1, w2, b2, w3, b3)

    try:
        out = _call(single_buffer_resident=True)
    except Exception:
        # Fallback if this jax build rejects pl.Buffered(1) on resident blocks.
        out = _call(single_buffer_resident=False)

    return out if Lp == L else out[:, :L]


def init_params(key, in_features, labels_num=10):
    """Deterministic init mimicking nn.Linear's U(-1/sqrt(fan_in), 1/sqrt(fan_in))."""
    dims = [(in_features, 256), (256, 128), (128, labels_num)]
    params = {}
    for i, (fan_in, fan_out) in enumerate(dims, start=1):
        key, kw, kb = jax.random.split(key, 3)
        bound = 1.0 / (fan_in ** 0.5)
        params[f"w{i}"] = jax.random.uniform(
            kw, (fan_in, fan_out), jnp.float32, -bound, bound)
        params[f"b{i}"] = jax.random.uniform(
            kb, (fan_out,), jnp.float32, -bound, bound)
    return params


def _reference_forward(x, p):
    # Pure-JAX reference with the same bf16-input / f32-accumulate matmuls.
    bf = jnp.bfloat16
    h = jnp.dot(x.astype(bf), p["w1"].astype(bf),
                preferred_element_type=jnp.float32) + p["b1"]
    h = jnp.maximum(h, 0.0)
    h = jnp.dot(h.astype(bf), p["w2"].astype(bf),
                preferred_element_type=jnp.float32) + p["b2"]
    h = jnp.maximum(h, 0.0)
    return jnp.dot(h.astype(bf), p["w3"].astype(bf),
                   preferred_element_type=jnp.float32) + p["b3"]


if __name__ == "__main__":
    key = jax.random.PRNGKey(0)

    # (name, B, channels, spatial, labels, forward kwargs, tolerance)
    configs = [
        # lane-aligned D (8*4*4=128), resident w1, partial last batch tile.
        ("aligned-D", 40, 8, 4, 10, dict(), 3e-3),
        # unaligned small D (4*4*4=64) handled as a full-dim block (no host pad),
        # bf16 logits to halve output writeback.
        ("small-D-bf16-out", 24, 4, 4, 10, dict(out_dtype=jnp.bfloat16), 3e-2),
        # forced K-split over D (12*4*4=192 -> padded to 256, w1 streamed).
        ("k-split", 32, 12, 4, 10, dict(max_w1_tile_bytes=64 * 1024), 3e-3),
    ]

    for name, B, C, S, L, kwargs, tol in configs:
        key, kx, kp = jax.random.split(key, 3)
        D = C * S * S
        # Feature map in NCHW, flattened exactly like x.view(B, -1) in PyTorch.
        feat = jax.random.normal(kx, (B, C, S, S), jnp.float32)
        x = feat.reshape(B, D)

        raw = init_params(kp, D, L)
        prepared = prepare_params(raw)          # one-time weight prep (hoisted)

        out = jax.block_until_ready(
            label_predictor_forward(x, prepared, **kwargs))
        ref = _reference_forward(x, raw)

        assert out.shape == (B, L), (name, out.shape)
        err = float(jnp.max(jnp.abs(out.astype(jnp.float32) - ref)))
        assert err <= tol, (name, err)

    print("KERNEL_OK")
</pallas_src>

<mosaic_0001>
module attributes {stable_mosaic.version = 11 : i64} {
  func.func @_mlp_kernel(%arg0: i32, %arg1: i32, %arg2: memref<32x128xf32, #tpu.memory_space<vmem>>, %arg3: memref<128x256xbf16, #tpu.memory_space<vmem>>, %arg4: memref<1x256xf32, #tpu.memory_space<vmem>>, %arg5: memref<256x128xbf16, #tpu.memory_space<vmem>>, %arg6: memref<1x128xf32, #tpu.memory_space<vmem>>, %arg7: memref<128x128xbf16, #tpu.memory_space<vmem>>, %arg8: memref<1x128xf32, #tpu.memory_space<vmem>>, %arg9: memref<32x128xf32, #tpu.memory_space<vmem>>, %arg10: memref<32x256xf32, #tpu.memory_space<vmem>>) attributes {dimension_semantics = [#tpu.dimension_semantics<parallel>, #tpu.dimension_semantics<arbitrary>], iteration_bounds = array<i64: 2, 1>, scalar_prefetch = 0 : i64, scratch_operands = 1 : i64, tpu.core_type = #tpu.core_type<tc>, window_params = [{transform_indices = @transform_0, window_bounds = array<i64: 32, 128>}, {pipeline_mode = #tpu.pipeline_mode<synchronous>, transform_indices = @transform_1, window_bounds = array<i64: 128, 256>}, {pipeline_mode = #tpu.pipeline_mode<synchronous>, transform_indices = @transform_2, window_bounds = array<i64: 1, 256>}, {pipeline_mode = #tpu.pipeline_mode<synchronous>, transform_indices = @transform_3, window_bounds = array<i64: 256, 128>}, {pipeline_mode = #tpu.pipeline_mode<synchronous>, transform_indices = @transform_4, window_bounds = array<i64: 1, 128>}, {pipeline_mode = #tpu.pipeline_mode<synchronous>, transform_indices = @transform_5, window_bounds = array<i64: 128, 128>}, {pipeline_mode = #tpu.pipeline_mode<synchronous>, transform_indices = @transform_6, window_bounds = array<i64: 1, 128>}, {transform_indices = @transform_7, window_bounds = array<i64: 32, 128>}]} {
    %c0_i32 = arith.constant 0 : i32
    %0 = arith.cmpi eq, %arg1, %c0_i32 : i32
    %1 = arith.extui %0 : i1 to i32
    %c0_i32_0 = arith.constant 0 : i32
    %2 = arith.cmpi ne, %1, %c0_i32_0 : i32
    scf.if %2 {
      %cst_10 = arith.constant 0.000000e+00 : f32
      %13 = vector.broadcast %cst_10 : f32 to vector<32x256xf32>
      %c0_11 = arith.constant 0 : index
      %c0_12 = arith.constant 0 : index
      %14 = vector.load %arg10[%c0_11, %c0_12] : memref<32x256xf32, #tpu.memory_space<vmem>>, vector<32x256xf32>
      tpu.vector_store %arg10[%c0_11, %c0_12], %13 {strides = array<i32>} : memref<32x256xf32, #tpu.memory_space<vmem>>, vector<32x256xf32>,
    } else {
    }
    %c0 = arith.constant 0 : index
    %c0_1 = arith.constant 0 : index
    %3 = vector.load %arg10[%c0, %c0_1] : memref<32x256xf32, #tpu.memory_space<vmem>>, vector<32x256xf32>
    %c0_2 = arith.constant 0 : index
    %c0_3 = arith.constant 0 : index
    %4 = vector.load %arg2[%c0_2, %c0_3] : memref<32x128xf32, #tpu.memory_space<vmem>>, vector<32x128xf32>
    %5 = arith.truncf %4 : vector<32x128xf32> to vector<32x128xbf16>
    %c0_4 = arith.constant 0 : index
    %c0_5 = arith.constant 0 : index
    %6 = vector.load %arg3[%c0_4, %c0_5] : memref<128x256xbf16, #tpu.memory_space<vmem>>, vector<128x256xbf16>
    %cst = arith.constant dense<0.000000e+00> : vector<32x256xf32>
    %7 = tpu.matmul %5, %6, %cst {dimension_numbers = #tpu.dot_dimension_numbers<[1], [0], [0], [1], [0, 0, 1, 1], [], []>} : vector<32x128xbf16>, vector<128x256xbf16>, vector<32x256xf32> -> vector<32x256xf32>
    %8 = arith.addf %3, %7 : vector<32x256xf32>
    %c0_6 = arith.constant 0 : index
    %c0_7 = arith.constant 0 : index
    %9 = vector.load %arg10[%c0_6, %c0_7] : memref<32x256xf32, #tpu.memory_space<vmem>>, vector<32x256xf32>
    tpu.vector_store %arg10[%c0_6, %c0_7], %8 {strides = array<i32>} : memref<32x256xf32, #tpu.memory_space<vmem>>, vector<32x256xf32>,
    %c0_i32_8 = arith.constant 0 : i32
    %10 = arith.cmpi eq, %arg1, %c0_i32_8 : i32
    %11 = arith.extui %10 : i1 to i32
    %c0_i32_9 = arith.constant 0 : i32
    %12 = arith.cmpi ne, %11, %c0_i32_9 : i32
    scf.if %12 {
      %c0_10 = arith.constant 0 : index
      %c0_11 = arith.constant 0 : index
      %13 = vector.load %arg10[%c0_10, %c0_11] : memref<32x256xf32, #tpu.memory_space<vmem>>, vector<32x256xf32>
      %c0_12 = arith.constant 0 : index
      %c0_13 = arith.constant 0 : index
      %14 = vector.load %arg4[%c0_12, %c0_13] : memref<1x256xf32, #tpu.memory_space<vmem>>, vector<1x256xf32>
      %15 = vector.broadcast %14 : vector<1x256xf32> to vector<32x256xf32>
      %16 = arith.addf %13, %15 : vector<32x256xf32>
      %cst_14 = arith.constant 0.000000e+00 : f32
      %17 = vector.broadcast %cst_14 : f32 to vector<32x256xf32>
      %18 = arith.maximumf %16, %17 : vector<32x256xf32>
      %19 = arith.truncf %18 : vector<32x256xf32> to vector<32x256xbf16>
      %c0_15 = arith.constant 0 : index
      %c0_16 = arith.constant 0 : index
      %20 = vector.load %arg5[%c0_15, %c0_16] : memref<256x128xbf16, #tpu.memory_space<vmem>>, vector<256x128xbf16>
      %cst_17 = arith.constant dense<0.000000e+00> : vector<32x128xf32>
      %21 = tpu.matmul %19, %20, %cst_17 {dimension_numbers = #tpu.dot_dimension_numbers<[1], [0], [0], [1], [0, 0, 1, 1], [], []>} : vector<32x256xbf16>, vector<256x128xbf16>, vector<32x128xf32> -> vector<32x128xf32>
      %c0_18 = arith.constant 0 : index
      %c0_19 = arith.constant 0 : index
      %22 = vector.load %arg6[%c0_18, %c0_19] : memref<1x128xf32, #tpu.memory_space<vmem>>, vector<1x128xf32>
      %23 = vector.broadcast %22 : vector<1x128xf32> to vector<32x128xf32>
      %24 = arith.addf %21, %23 : vector<32x128xf32>
      %cst_20 = arith.constant 0.000000e+00 : f32
      %25 = vector.broadcast %cst_20 : f32 to vector<32x128xf32>
      %26 = arith.maximumf %24, %25 : vector<32x128xf32>
      %27 = arith.truncf %26 : vector<32x128xf32> to vector<32x128xbf16>
      %c0_21 = arith.constant 0 : index
      %c0_22 = arith.constant 0 : index
      %28 = vector.load %arg7[%c0_21, %c0_22] : memref<128x128xbf16, #tpu.memory_space<vmem>>, vector<128x128xbf16>
      %cst_23 = arith.constant dense<0.000000e+00> : vector<32x128xf32>
      %29 = tpu.matmul %27, %28, %cst_23 {dimension_numbers = #tpu.dot_dimension_numbers<[1], [0], [0], [1], [0, 0, 1, 1], [], []>} : vector<32x128xbf16>, vector<128x128xbf16>, vector<32x128xf32> -> vector<32x128xf32>
      %c0_24 = arith.constant 0 : index
      %c0_25 = arith.constant 0 : index
      %30 = vector.load %arg8[%c0_24, %c0_25] : memref<1x128xf32, #tpu.memory_space<vmem>>, vector<1x128xf32>
      %31 = vector.broadcast %30 : vector<1x128xf32> to vector<32x128xf32>
      %32 = arith.addf %29, %31 : vector<32x128xf32>
      %c0_26 = arith.constant 0 : index
      %c0_27 = arith.constant 0 : index
      %33 = vector.load %arg9[%c0_26, %c0_27] : memref<32x128xf32, #tpu.memory_space<vmem>>, vector<32x128xf32>
      tpu.vector_store %arg9[%c0_26, %c0_27], %32 {strides = array<i32>} : memref<32x128xf32, #tpu.memory_space<vmem>>, vector<32x128xf32>,
    } else {
    }
    return
  }
  func.func @transform_0(%arg0: i32, %arg1: i32) -> (i32, i32) {
    %c0_i32 = arith.constant 0 : i32
    return %arg0, %arg1 : i32, i32
  }
  func.func @transform_1(%arg0: i32, %arg1: i32) -> (i32, i32) {
    %c0_i32 = arith.constant 0 : i32
    %c0_i32_0 = arith.constant 0 : i32
    %c0_i32_1 = arith.constant 0 : i32
    return %c0_i32, %c0_i32_0 : i32, i32
  }
  func.func @transform_2(%arg0: i32, %arg1: i32) -> (i32, i32) {
    %c0_i32 = arith.constant 0 : i32
    %c0_i32_0 = arith.constant 0 : i32
    %c0_i32_1 = arith.constant 0 : i32
    return %c0_i32, %c0_i32_0 : i32, i32
  }
  func.func @transform_3(%arg0: i32, %arg1: i32) -> (i32, i32) {
    %c0_i32 = arith.constant 0 : i32
    %c0_i32_0 = arith.constant 0 : i32
    %c0_i32_1 = arith.constant 0 : i32
    return %c0_i32, %c0_i32_0 : i32, i32
  }
  func.func @transform_4(%arg0: i32, %arg1: i32) -> (i32, i32) {
    %c0_i32 = arith.constant 0 : i32
    %c0_i32_0 = arith.constant 0 : i32
    %c0_i32_1 = arith.constant 0 : i32
    return %c0_i32, %c0_i32_0 : i32, i32
  }
  func.func @transform_5(%arg0: i32, %arg1: i32) -> (i32, i32) {
    %c0_i32 = arith.constant 0 : i32
    %c0_i32_0 = arith.constant 0 : i32
    %c0_i32_1 = arith.constant 0 : i32
    return %c0_i32, %c0_i32_0 : i32, i32
  }
  func.func @transform_6(%arg0: i32, %arg1: i32) -> (i32, i32) {
    %c0_i32 = arith.constant 0 : i32
    %c0_i32_0 = arith.constant 0 : i32
    %c0_i32_1 = arith.constant 0 : i32
    return %c0_i32, %c0_i32_0 : i32, i32
  }
  func.func @transform_7(%arg0: i32, %arg1: i32) -> (i32, i32) {
    %c0_i32 = arith.constant 0 : i32
    %c0_i32_0 = arith.constant 0 : i32
    return %arg0, %c0_i32 : i32, i32
  }
}

module attributes {stable_mosaic.version = 11 : i64} {
  func.func @_mlp_kernel(%arg0: i32, %arg1: i32, %arg2: memref<32x128xf32, #tpu.memory_space<vmem>>, %arg3: memref<128x256xbf16, #tpu.memory_space<vmem>>, %arg4: memref<1x256xf32, #tpu.memory_space<vmem>>, %arg5: memref<256x128xbf16, #tpu.memory_space<vmem>>, %arg6: memref<1x128xf32, #tpu.memory_space<vmem>>, %arg7: memref<128x128xbf16, #tpu.memory_space<vmem>>, %arg8: memref<1x128xf32, #tpu.memory_space<vmem>>, %arg9: memref<32x128xf32, #tpu.memory_space<vmem>>, %arg10: memref<32x256xf32, #tpu.memory_space<vmem>>) attributes {dimension_semantics = [#tpu.dimension_semantics<parallel>, #tpu.dimension_semantics<arbitrary>], iteration_bounds = array<i64: 2, 1>, scalar_prefetch = 0 : i64, scratch_operands = 1 : i64, tpu.core_type = #tpu.core_type<tc>, window_params = [{transform_indices = @transform_0, window_bounds = array<i64: 32, 128>}, {pipeline_mode = #tpu.pipeline_mode<synchronous>, transform_indices = @transform_1, window_bounds = array<i64: 128, 256>}, {pipeline_mode = #tpu.pipeline_mode<synchronous>, transform_indices = @transform_2, window_bounds = array<i64: 1, 256>}, {pipeline_mode = #tpu.pipeline_mode<synchronous>, transform_indices = @transform_3, window_bounds = array<i64: 256, 128>}, {pipeline_mode = #tpu.pipeline_mode<synchronous>, transform_indices = @transform_4, window_bounds = array<i64: 1, 128>}, {pipeline_mode = #tpu.pipeline_mode<synchronous>, transform_indices = @transform_5, window_bounds = array<i64: 128, 128>}, {pipeline_mode = #tpu.pipeline_mode<synchronous>, transform_indices = @transform_6, window_bounds = array<i64: 1, 128>}, {transform_indices = @transform_7, window_bounds = array<i64: 32, 128>}]} {
    %c0_i32 = arith.constant 0 : i32
    %0 = arith.cmpi eq, %arg1, %c0_i32 : i32
    %1 = arith.extui %0 : i1 to i32
    %c0_i32_0 = arith.constant 0 : i32
    %2 = arith.cmpi ne, %1, %c0_i32_0 : i32
    scf.if %2 {
      %cst_10 = arith.constant 0.000000e+00 : f32
      %13 = vector.broadcast %cst_10 : f32 to vector<32x256xf32>
      %c0_11 = arith.constant 0 : index
      %c0_12 = arith.constant 0 : index
      %14 = vector.load %arg10[%c0_11, %c0_12] : memref<32x256xf32, #tpu.memory_space<vmem>>, vector<32x256xf32>
      tpu.vector_store %arg10[%c0_11, %c0_12], %13 {strides = array<i32>} : memref<32x256xf32, #tpu.memory_space<vmem>>, vector<32x256xf32>,
    } else {
    }
    %c0 = arith.constant 0 : index
    %c0_1 = arith.constant 0 : index
    %3 = vector.load %arg10[%c0, %c0_1] : memref<32x256xf32, #tpu.memory_space<vmem>>, vector<32x256xf32>
    %c0_2 = arith.constant 0 : index
    %c0_3 = arith.constant 0 : index
    %4 = vector.load %arg2[%c0_2, %c0_3] : memref<32x128xf32, #tpu.memory_space<vmem>>, vector<32x128xf32>
    %5 = arith.truncf %4 : vector<32x128xf32> to vector<32x128xbf16>
    %c0_4 = arith.constant 0 : index
    %c0_5 = arith.constant 0 : index
    %6 = vector.load %arg3[%c0_4, %c0_5] : memref<128x256xbf16, #tpu.memory_space<vmem>>, vector<128x256xbf16>
    %cst = arith.constant dense<0.000000e+00> : vector<32x256xf32>
    %7 = tpu.matmul %5, %6, %cst {dimension_numbers = #tpu.dot_dimension_numbers<[1], [0], [0], [1], [0, 0, 1, 1], [], []>} : vector<32x128xbf16>, vector<128x256xbf16>, vector<32x256xf32> -> vector<32x256xf32>
    %8 = arith.addf %3, %7 : vector<32x256xf32>
    %c0_6 = arith.constant 0 : index
    %c0_7 = arith.constant 0 : index
    %9 = vector.load %arg10[%c0_6, %c0_7] : memref<32x256xf32, #tpu.memory_space<vmem>>, vector<32x256xf32>
    tpu.vector_store %arg10[%c0_6, %c0_7], %8 {strides = array<i32>} : memref<32x256xf32, #tpu.memory_space<vmem>>, vector<32x256xf32>,
    %c0_i32_8 = arith.constant 0 : i32
    %10 = arith.cmpi eq, %arg1, %c0_i32_8 : i32
    %11 = arith.extui %10 : i1 to i32
    %c0_i32_9 = arith.constant 0 : i32
    %12 = arith.cmpi ne, %11, %c0_i32_9 : i32
    scf.if %12 {
      %c0_10 = arith.constant 0 : index
      %c0_11 = arith.constant 0 : index
      %13 = vector.load %arg10[%c0_10, %c0_11] : memref<32x256xf32, #tpu.memory_space<vmem>>, vector<32x256xf32>
      %c0_12 = arith.constant 0 : index
      %c0_13 = arith.constant 0 : index
      %14 = vector.load %arg4[%c0_12, %c0_13] : memref<1x256xf32, #tpu.memory_space<vmem>>, vector<1x256xf32>
      %15 = vector.broadcast %14 : vector<1x256xf32> to vector<32x256xf32>
      %16 = arith.addf %13, %15 : vector<32x256xf32>
      %cst_14 = arith.constant 0.000000e+00 : f32
      %17 = vector.broadcast %cst_14 : f32 to vector<32x256xf32>
      %18 = arith.maximumf %16, %17 : vector<32x256xf32>
      %19 = arith.truncf %18 : vector<32x256xf32> to vector<32x256xbf16>
      %c0_15 = arith.constant 0 : index
      %c0_16 = arith.constant 0 : index
      %20 = vector.load %arg5[%c0_15, %c0_16] : memref<256x128xbf16, #tpu.memory_space<vmem>>, vector<256x128xbf16>
      %cst_17 = arith.constant dense<0.000000e+00> : vector<32x128xf32>
      %21 = tpu.matmul %19, %20, %cst_17 {dimension_numbers = #tpu.dot_dimension_numbers<[1], [0], [0], [1], [0, 0, 1, 1], [], []>} : vector<32x256xbf16>, vector<256x128xbf16>, vector<32x128xf32> -> vector<32x128xf32>
      %c0_18 = arith.constant 0 : index
      %c0_19 = arith.constant 0 : index
      %22 = vector.load %arg6[%c0_18, %c0_19] : memref<1x128xf32, #tpu.memory_space<vmem>>, vector<1x128xf32>
      %23 = vector.broadcast %22 : vector<1x128xf32> to vector<32x128xf32>
      %24 = arith.addf %21, %23 : vector<32x128xf32>
      %cst_20 = arith.constant 0.000000e+00 : f32
      %25 = vector.broadcast %cst_20 : f32 to vector<32x128xf32>
      %26 = arith.maximumf %24, %25 : vector<32x128xf32>
      %27 = arith.truncf %26 : vector<32x128xf32> to vector<32x128xbf16>
      %c0_21 = arith.constant 0 : index
      %c0_22 = arith.constant 0 : index
      %28 = vector.load %arg7[%c0_21, %c0_22] : memref<128x128xbf16, #tpu.memory_space<vmem>>, vector<128x128xbf16>
      %cst_23 = arith.constant dense<0.000000e+00> : vector<32x128xf32>
      %29 = tpu.matmul %27, %28, %cst_23 {dimension_numbers = #tpu.dot_dimension_numbers<[1], [0], [0], [1], [0, 0, 1, 1], [], []>} : vector<32x128xbf16>, vector<128x128xbf16>, vector<32x128xf32> -> vector<32x128xf32>
      %c0_24 = arith.constant 0 : index
      %c0_25 = arith.constant 0 : index
      %30 = vector.load %arg8[%c0_24, %c0_25] : memref<1x128xf32, #tpu.memory_space<vmem>>, vector<1x128xf32>
      %31 = vector.broadcast %30 : vector<1x128xf32> to vector<32x128xf32>
      %32 = arith.addf %29, %31 : vector<32x128xf32>
      %c0_26 = arith.constant 0 : index
      %c0_27 = arith.constant 0 : index
      %33 = vector.load %arg9[%c0_26, %c0_27] : memref<32x128xf32, #tpu.memory_space<vmem>>, vector<32x128xf32>
      tpu.vector_store %arg9[%c0_26, %c0_27], %32 {strides = array<i32>} : memref<32x128xf32, #tpu.memory_space<vmem>>, vector<32x128xf32>,
    } else {
    }
    return
  }
  func.func @transform_0(%arg0: i32, %arg1: i32) -> (i32, i32) {
    %c0_i32 = arith.constant 0 : i32
    return %arg0, %arg1 : i32, i32
  }
  func.func @transform_1(%arg0: i32, %arg1: i32) -> (i32, i32) {
    %c0_i32 = arith.constant 0 : i32
    %c0_i32_0 = arith.constant 0 : i32
    %c0_i32_1 = arith.constant 0 : i32
    return %c0_i32, %c0_i32_0 : i32, i32
  }
  func.func @transform_2(%arg0: i32, %arg1: i32) -> (i32, i32) {
    %c0_i32 = arith.constant 0 : i32
    %c0_i32_0 = arith.constant 0 : i32
    %c0_i32_1 = arith.constant 0 : i32
    return %c0_i32, %c0_i32_0 : i32, i32
  }
  func.func @transform_3(%arg0: i32, %arg1: i32) -> (i32, i32) {
    %c0_i32 = arith.constant 0 : i32
    %c0_i32_0 = arith.constant 0 : i32
    %c0_i32_1 = arith.constant 0 : i32
    return %c0_i32, %c0_i32_0 : i32, i32
  }
  func.func @transform_4(%arg0: i32, %arg1: i32) -> (i32, i32) {
    %c0_i32 = arith.constant 0 : i32
    %c0_i32_0 = arith.constant 0 : i32
    %c0_i32_1 = arith.constant 0 : i32
    return %c0_i32, %c0_i32_0 : i32, i32
  }
  func.func @transform_5(%arg0: i32, %arg1: i32) -> (i32, i32) {
    %c0_i32 = arith.constant 0 : i32
    %c0_i32_0 = arith.constant 0 : i32
    %c0_i32_1 = arith.constant 0 : i32
    return %c0_i32, %c0_i32_0 : i32, i32
  }
  func.func @transform_6(%arg0: i32, %arg1: i32) -> (i32, i32) {
    %c0_i32 = arith.constant 0 : i32
    %c0_i32_0 = arith.constant 0 : i32
    %c0_i32_1 = arith.constant 0 : i32
    return %c0_i32, %c0_i32_0 : i32, i32
  }
  func.func @transform_7(%arg0: i32, %arg1: i32) -> (i32, i32) {
    %c0_i32 = arith.constant 0 : i32
    %c0_i32_0 = arith.constant 0 : i32
    return %arg0, %c0_i32 : i32, i32
  }
}

</mosaic_0001>

<llo_original>
// kernel: tpu_custom_call.1
$region0: #{tpu_custom_call.1}
  #allocation0 [shape = 'u32[]', space=smem, size = 0x4, offset = 0x4, fixed_abs, tag = 'smem constant byte address 0x4 - core index']
  #allocation1 [shape = 'u32[72,128]{1,0:T(1,128)}', space=vmem, size = 0x9000, scoped, tag = 'internal scratch']
  #allocation2 [shape = 'f32[32,256]{1,0:T(8,128)}', space=vmem, size = 0x8000, scoped, tag = 'scratch operand']
  %s0 = inlined_call_operand.hbm [shape: f32[40,128], index: 0, kind: input, shape index: {}]
  %s1 = inlined_call_operand.hbm [shape: bf16[128,256], index: 1, kind: input, shape index: {}]
  %s2 = inlined_call_operand.hbm [shape: f32[1,256], index: 2, kind: input, shape index: {}]
  %s3 = inlined_call_operand.hbm [shape: bf16[256,128], index: 3, kind: input, shape index: {}]
  %s4 = inlined_call_operand.vmem [shape: f32[1,128], index: 4, kind: input, shape index: {}]
  %s5 = inlined_call_operand.hbm [shape: bf16[128,128], index: 5, kind: input, shape index: {}]
  %s6 = inlined_call_operand.vmem [shape: f32[1,128], index: 6, kind: input, shape index: {}]
  %s7 = inlined_call_operand.hbm [shape: f32[40,128], index: 7, kind: output, shape index: {}]
  %s8 = sld [smem:[#allocation0]]
  $region89: #{tpu_custom_call.1} parent=0
    _
  %s10 = ssub.s32 1, %s8
  %s11 = scalar_select 0, %s10, %s8
  $region1: #{tpu_custom_call.1} parent=0
    #allocation3 [shape = 'u8[32768]{0}', space=vmem, size = 0x8000, scoped, tag = 'input window, operand 0']
    #allocation4 [shape = 's32[2]{0}', space=sflag, size = 0x8, scoped, tag = 'scoped memory for tpu_custom_call.1']
    #allocation5 [shape = 's32[2]{0}', space=sflag, size = 0x8, scoped, tag = 'scoped memory for tpu_custom_call.1']
    #allocation6 [shape = 'u8[65536]{0}', space=vmem, size = 0x10000, scoped, tag = 'input window, operand 1, single buffered']
    #allocation7 [shape = 's32[1]{0}', space=sflag, size = 0x4, scoped, tag = 'scoped memory for tpu_custom_call.1']
    #allocation8 [shape = 'u8[1024]{0}', space=vmem, size = 0x400, scoped, tag = 'input window, operand 2, single buffered']
    #allocation9 [shape = 'u8[65536]{0}', space=vmem, size = 0x10000, scoped, tag = 'input window, operand 3, single buffered']
    #allocation10 [shape = 's32[1]{0}', space=sflag, size = 0x4, scoped, tag = 'scoped memory for tpu_custom_call.1']
    #allocation11 [shape = 'u8[32768]{0}', space=vmem, size = 0x8000, scoped, tag = 'input window, operand 5, single buffered']
    #allocation12 [shape = 'u8[32768]{0}', space=vmem, size = 0x8000, scoped, tag = 'output window, operand 0']
    %12 = vsyncpa [#allocation4], 0
    %s13 = scalar_lea.sflag [#allocation4], 1
    %14 = vsyncpa %s13, 0
    %15 = vsyncpa [#allocation7], 0
    %16 = vsyncpa [#allocation10], 0
    %17 = vsyncpa [#allocation5], 0
    %s18 = scalar_lea.sflag [#allocation5], 1
    %19 = vsyncpa %s18, 0
    loop: start=0, step=1, limit=4
    $region2: #{tpu_custom_call.1} parent=1 // loop_pre_header
      _
    $region3: #{tpu_custom_call.1} parent=1 // loop_header
      %s21 = sphi 0, %s25
      %p22 = scmp.ge.s32.totalorder %s21, 4
      %s28 = sphi 0, %s40
      %s29 = sphi 0, %s36
      %s30 = sphi 0, %s28
      %s31 = sphi 0, %s29
      %s32 = sphi 0, %s30
      %s33 = sphi 0, %s31
      %s45 = sphi 0, %s47
      %s48 = sphi 0, %s45
      %s49 = sphi 0, %s48
      %s65 = sphi 0, %s49
      %s69 = sphi 0, %s69
      %s71 = sphi 0, %s69
      %s72 = sphi 0, %s71
      %s86 = sphi 0, %s72
      %s90 = sphi 0, %s90
      %s92 = sphi 0, %s90
      %s93 = sphi 0, %s92
      %s107 = sphi 0, %s93
      %s111 = sphi 0, %s111
      %s113 = sphi 0, %s111
      %s114 = sphi 0, %s113
      %s128 = sphi 0, %s114
      %s132 = sphi 0, %s132
      %s134 = sphi 0, %s132
      %s135 = sphi 0, %s134
      %s149 = sphi 0, %s135
      %s153 = sphi 0, %s153
      %s155 = sphi 0, %s153
      %s156 = sphi 0, %s155
      %s170 = sphi 0, %s156
      %s174 = sphi 0, %s174
      %s176 = sphi 0, %s174
      %s177 = sphi 0, %s176
      %s191 = sphi 0, %s177
      %s197 = sphi 0, %s199
      %s200 = sphi 0, %s197
      %s201 = sphi 0, %s200
      %s217 = sphi 0, %s201
    $region4: #{tpu_custom_call.1} parent=1 // loop_header_branch
      %24 = sbr.rel (%p22) target = $region8
    $region5: #{tpu_custom_call.1} parent=1 // loop_body
      %s26 = ssub.s32 %s21, 1
      %s27 = ssub.s32 %s21, 2
      %s34 = sadd.s32 1, %s29
      %p35 = scmp.ge.s32.totalorder %s34, 1
      %s36 = scalar_select %p35, 0, %s34
      %s37 = sadd.s32 1, %s28
      %s38 = scalar_select %p35, %s37, %s28
      %p39 = scmp.ge.s32.totalorder %s38, 2
      %s40 = scalar_select %p39, 0, %s38
      %s41 = ssub.s32 %s28, %s40
      %s42 = ssub.s32 %s29, %s36
      %s43 = sor.u32 %s41, %s42
      %p44 = scmp.eq.s32.totalorder %s43, 0
      %s46 = sadd.s32 %s45, 1
      %s47 = scalar_select %p44, %s45, %s46
      %p50 = pneg %p44
      %p51 = scmp.eq.s32.totalorder %s21, 1
      %p52 = por %p50, %p51
      %p53 = scmp.ne.s32.totalorder %s45, %s48
      %p54 = scmp.eq.s32.totalorder %s21, 0
      %p55 = por %p53, %p54
      %p56 = scmp.ne.s32.totalorder %s45, %s48
      %p57 = scmp.eq.s32.totalorder %s26, 1
      %p58 = por %p56, %p57
      %p59 = scmp.ne.s32.totalorder %s48, %s49
      %p60 = scmp.eq.s32.totalorder %s26, 0
      %p61 = por %p59, %p60
      %p62 = scmp.ne.s32.totalorder %s48, %s49
      %p63 = scmp.eq.s32.totalorder %s27, 1
      %p64 = por %p62, %p63
      %p66 = scmp.ne.s32.totalorder %s49, %s65
      %p67 = scmp.eq.s32.totalorder %s27, 0
      %p68 = por %p66, %p67
      %s70 = sadd.s32 %s69, 1
      %p73 = scmp.eq.s32.totalorder %s21, 1
      %p74 = scmp.ne.s32.totalorder %s69, %s71
      %p75 = scmp.eq.s32.totalorder %s21, 0
      %p76 = por %p74, %p75
      %p77 = scmp.ne.s32.totalorder %s69, %s71
      %p78 = scmp.eq.s32.totalorder %s26, 1
      %p79 = por %p77, %p78
      %p80 = scmp.ne.s32.totalorder %s71, %s72
      %p81 = scmp.eq.s32.totalorder %s26, 0
      %p82 = por %p80, %p81
      %p83 = scmp.ne.s32.totalorder %s71, %s72
      %p84 = scmp.eq.s32.totalorder %s27, 1
      %p85 = por %p83, %p84
      %p87 = scmp.ne.s32.totalorder %s72, %s86
      %p88 = scmp.eq.s32.totalorder %s27, 0
      %p89 = por %p87, %p88
      %s91 = sadd.s32 %s90, 1
      %p94 = scmp.eq.s32.totalorder %s21, 1
      %p95 = scmp.ne.s32.totalorder %s90, %s92
      %p96 = scmp.eq.s32.totalorder %s21, 0
      %p97 = por %p95, %p96
      %p98 = scmp.ne.s32.totalorder %s90, %s92
      %p99 = scmp.eq.s32.totalorder %s26, 1
      %p100 = por %p98, %p99
      %p101 = scmp.ne.s32.totalorder %s92, %s93
      %p102 = scmp.eq.s32.totalorder %s26, 0
      %p103 = por %p101, %p102
      %p104 = scmp.ne.s32.totalorder %s92, %s93
      %p105 = scmp.eq.s32.totalorder %s27, 1
      %p106 = por %p104, %p105
      %p108 = scmp.ne.s32.totalorder %s93, %s107
      %p109 = scmp.eq.s32.totalorder %s27, 0
      %p110 = por %p108, %p109
      %s112 = sadd.s32 %s111, 1
      %p115 = scmp.eq.s32.totalorder %s21, 1
      %p116 = scmp.ne.s32.totalorder %s111, %s113
      %p117 = scmp.eq.s32.totalorder %s21, 0
      %p118 = por %p116, %p117
      %p119 = scmp.ne.s32.totalorder %s111, %s113
      %p120 = scmp.eq.s32.totalorder %s26, 1
      %p121 = por %p119, %p120
      %p122 = scmp.ne.s32.totalorder %s113, %s114
      %p123 = scmp.eq.s32.totalorder %s26, 0
      %p124 = por %p122, %p123
      %p125 = scmp.ne.s32.totalorder %s113, %s114
      %p126 = scmp.eq.s32.totalorder %s27, 1
      %p127 = por %p125, %p126
      %p129 = scmp.ne.s32.totalorder %s114, %s128
      %p130 = scmp.eq.s32.totalorder %s27, 0
      %p131 = por %p129, %p130
      %s133 = sadd.s32 %s132, 1
      %p136 = scmp.eq.s32.totalorder %s21, 1
      %p137 = scmp.ne.s32.totalorder %s132, %s134
      %p138 = scmp.eq.s32.totalorder %s21, 0
      %p139 = por %p137, %p138
      %p140 = scmp.ne.s32.totalorder %s132, %s134
      %p141 = scmp.eq.s32.totalorder %s26, 1
      %p142 = por %p140, %p141
      %p143 = scmp.ne.s32.totalorder %s134, %s135
      %p144 = scmp.eq.s32.totalorder %s26, 0
      %p145 = por %p143, %p144
      %p146 = scmp.ne.s32.totalorder %s134, %s135
      %p147 = scmp.eq.s32.totalorder %s27, 1
      %p148 = por %p146, %p147
      %p150 = scmp.ne.s32.totalorder %s135, %s149
      %p151 = scmp.eq.s32.totalorder %s27, 0
      %p152 = por %p150, %p151
      %s154 = sadd.s32 %s153, 1
      %p157 = scmp.eq.s32.totalorder %s21, 1
      %p158 = scmp.ne.s32.totalorder %s153, %s155
      %p159 = scmp.eq.s32.totalorder %s21, 0
      %p160 = por %p158, %p159
      %p161 = scmp.ne.s32.totalorder %s153, %s155
      %p162 = scmp.eq.s32.totalorder %s26, 1
      %p163 = por %p161, %p162
      %p164 = scmp.ne.s32.totalorder %s155, %s156
      %p165 = scmp.eq.s32.totalorder %s26, 0
      %p166 = por %p164, %p165
      %p167 = scmp.ne.s32.totalorder %s155, %s156
      %p168 = scmp.eq.s32.totalorder %s27, 1
      %p169 = por %p167, %p168
      %p171 = scmp.ne.s32.totalorder %s156, %s170
      %p172 = scmp.eq.s32.totalorder %s27, 0
      %p173 = por %p171, %p172
      %s175 = sadd.s32 %s174, 1
      %p178 = scmp.eq.s32.totalorder %s21, 1
      %p179 = scmp.ne.s32.totalorder %s174, %s176
      %p180 = scmp.eq.s32.totalorder %s21, 0
      %p181 = por %p179, %p180
      %p182 = scmp.ne.s32.totalorder %s174, %s176
      %p183 = scmp.eq.s32.totalorder %s26, 1
      %p184 = por %p182, %p183
      %p185 = scmp.ne.s32.totalorder %s176, %s177
      %p186 = scmp.eq.s32.totalorder %s26, 0
      %p187 = por %p185, %p186
      %p188 = scmp.ne.s32.totalorder %s176, %s177
      %p189 = scmp.eq.s32.totalorder %s27, 1
      %p190 = por %p188, %p189
      %p192 = scmp.ne.s32.totalorder %s177, %s191
      %p193 = scmp.eq.s32.totalorder %s27, 0
      %p194 = por %p192, %p193
      %s195 = ssub.s32 %s28, %s40
      %p196 = scmp.eq.s32.totalorder %s195, 0
      %s198 = sadd.s32 %s197, 1
      %s199 = scalar_select %p196, %s197, %s198
      %p202 = pneg %p196
      %p203 = scmp.eq.s32.totalorder %s21, 1
      %p204 = por %p202, %p203
      %p205 = scmp.ne.s32.totalorder %s197, %s200
      %p206 = scmp.eq.s32.totalorder %s21, 0
      %p207 = por %p205, %p206
      %p208 = scmp.ne.s32.totalorder %s197, %s200
      %p209 = scmp.eq.s32.totalorder %s26, 1
      %p210 = por %p208, %p209
      %p211 = scmp.ne.s32.totalorder %s200, %s201
      %p212 = scmp.eq.s32.totalorder %s26, 0
      %p213 = por %p211, %p212
      %p214 = scmp.ne.s32.totalorder %s200, %s201
      %p215 = scmp.eq.s32.totalorder %s27, 1
      %p216 = por %p214, %p215
      %p218 = scmp.ne.s32.totalorder %s201, %s217
      %p219 = scmp.eq.s32.totalorder %s27, 0
      %p220 = por %p218, %p219
      %p221 = scmp.le.s32.totalorder 1, %s21
      %p222 = scmp.lt.s32.totalorder %s21, 3
      %p223 = pnand %p221, %p222
      %p224 = pneg %p223
      // Predicated region
      $region9: #{tpu_custom_call.1} parent=5 // pred_check
        _
      $region10: #{tpu_custom_call.1} parent=5 // pred_check_branch
        %226 = sbr.rel (%p223) target = $region12
      $region11: #{tpu_custom_call.1} parent=5 // pred_region
        %s227 = ssub.s32 %s21, 1
        // Predicated region
        $region13: #{tpu_custom_call.1} parent=11 // pred_check
          %p228 = pneg %p82
        $region14: #{tpu_custom_call.1} parent=11 // pred_check_branch
          %230 = sbr.rel (%p228) target = $region16
        $region15: #{tpu_custom_call.1} parent=11 // pred_region
          %232 = vsyncadd [#allocation7], 0
          %s233 = sshll.u32 %s1, 4
          %s234 = int_to_ptr.hbm [resolvable:$true] %s233
          %s235 = sshll.u32 [#allocation6], 4
          %s236 = int_to_ptr.vmem [resolvable:$true] %s235
          %241 = dma.hbm_to_vmem [thread:$0]  %s234, 2048, %s236, [#allocation7], 128, 128, 8
        $region16: #{tpu_custom_call.1} parent=11 // pred_fallthru
          _
        // Predicated region
        $region17: #{tpu_custom_call.1} parent=11 // pred_check
          %p242 = pneg %p103
        $region18: #{tpu_custom_call.1} parent=11 // pred_check_branch
          %244 = sbr.rel (%p242) target = $region20
        $region19: #{tpu_custom_call.1} parent=11 // pred_region
          %246 = vsyncadd [#allocation7], 0
          %s248 = sshll.u32 %s2, 4
          %s249 = int_to_ptr.hbm [resolvable:$true] %s248
          %s250 = sshll.u32 [#allocation8], 4
          %s251 = int_to_ptr.vmem [resolvable:$true] %s250
          %253 = dma.hbm_to_vmem [thread:$0]  %s249, 32, %s251, [#allocation7]
        $region20: #{tpu_custom_call.1} parent=11 // pred_fallthru
          _
        // Predicated region
        $region21: #{tpu_custom_call.1} parent=11 // pred_check
          %p254 = pneg %p124
        $region22: #{tpu_custom_call.1} parent=11 // pred_check_branch
          %256 = sbr.rel (%p254) target = $region24
        $region23: #{tpu_custom_call.1} parent=11 // pred_region
          %258 = vsyncadd [#allocation10], 0
          %s259 = sshll.u32 %s3, 4
          %s260 = int_to_ptr.hbm [resolvable:$true] %s259
          %s261 = sshll.u32 [#allocation9], 4
          %s262 = int_to_ptr.vmem [resolvable:$true] %s261
          %267 = dma.hbm_to_vmem [thread:$0]  %s260, 2048, %s262, [#allocation10], 64, 64, 4
        $region24: #{tpu_custom_call.1} parent=11 // pred_fallthru
          _
        // Predicated region
        $region25: #{tpu_custom_call.1} parent=11 // pred_check
          %p268 = pneg %p145
        $region26: #{tpu_custom_call.1} parent=11 // pred_check_branch
          %270 = sbr.rel (%p268) target = $region28
        $region27: #{tpu_custom_call.1} parent=11 // pred_region
          _
        $region28: #{tpu_custom_call.1} parent=11 // pred_fallthru
          _
        // Predicated region
        $region29: #{tpu_custom_call.1} parent=11 // pred_check
          %p271 = pneg %p166
        $region30: #{tpu_custom_call.1} parent=11 // pred_check_branch
          %273 = sbr.rel (%p271) target = $region32
        $region31: #{tpu_custom_call.1} parent=11 // pred_region
          %275 = vsyncadd [#allocation10], 0
          %s276 = sshll.u32 %s5, 4
          %s277 = int_to_ptr.hbm [resolvable:$true] %s276
          %s278 = sshll.u32 [#allocation11], 4
          %s279 = int_to_ptr.vmem [resolvable:$true] %s278
          %284 = dma.hbm_to_vmem [thread:$0]  %s277, 1024, %s279, [#allocation10], 64, 64, 4
        $region32: #{tpu_custom_call.1} parent=11 // pred_fallthru
          _
        // Predicated region
        $region33: #{tpu_custom_call.1} parent=11 // pred_check
          %p285 = pneg %p187
        $region34: #{tpu_custom_call.1} parent=11 // pred_check_branch
          %287 = sbr.rel (%p285) target = $region36
        $region35: #{tpu_custom_call.1} parent=11 // pred_region
          _
        $region36: #{tpu_custom_call.1} parent=11 // pred_fallthru
          _
      $region12: #{tpu_custom_call.1} parent=5 // pred_fallthru
        _
      %p288 = scmp.lt.s32.totalorder %s21, 2
      // Predicated region
      $region37: #{tpu_custom_call.1} parent=5 // pred_check
        %p289 = pneg %p288
      $region38: #{tpu_custom_call.1} parent=5 // pred_check_branch
        %291 = sbr.rel (%p289) target = $region40
      $region39: #{tpu_custom_call.1} parent=5 // pred_region
        // Predicated region
        $region41: #{tpu_custom_call.1} parent=39 // pred_check
          %p292 = pneg %p55
        $region42: #{tpu_custom_call.1} parent=39 // pred_check_branch
          %294 = sbr.rel (%p292) target = $region44
        $region43: #{tpu_custom_call.1} parent=39 // pred_region
          %s295 = sand.u32 %s45, 1
          %s296 = scalar_lea.sflag [#allocation4], %s295
          %s297 = sand.u32 %s45, 1
          %s298 = smul.addr %s297, 32
          %s299 = scalar_lea.vmem [#allocation3], %s298
          %s300 = smul.u32 4, %s28
          %s301 = ssub.s32 5, %s300
          %p302 = scmp.lt.s32.totalorder %s301, 4
          %s303 = scalar_select %p302, %s301, 4
          %s304 = smul.u32 8, %s303
          %s305 = ssub.s32 32, %s304
          %s306 = sshll.u32 %s305, 4
          %307 = vsyncadd %s296, %s306
          %p308 = scmp.ne.s32.totalorder 0, %s304
          %s309 = sadd.s32 %s29, %s300
          %s310 = smul.addr %s309, 8
          %s311 = scalar_lea.hbm %s0, %s310
          %s312 = smul.u32 8, %s303
          %s313 = sshll.u32 %s311, 4
          %s314 = int_to_ptr.hbm [resolvable:$true] %s313
          %s315 = sshll.u32 %s299, 4
          %s316 = int_to_ptr.vmem [resolvable:$true] %s315
          %s317 = sshll.u32 %s312, 4
          %321 = dma.hbm_to_vmem [thread:$0]  (%p308), %s314, %s317, %s316, %s296, 128, 128, 8
        $region44: #{tpu_custom_call.1} parent=39 // pred_fallthru
          _
      $region40: #{tpu_custom_call.1} parent=5 // pred_fallthru
        _
      %p322 = scmp.le.s32.totalorder 1, %s21
      %p323 = scmp.lt.s32.totalorder %s21, 3
      %p324 = pnand %p322, %p323
      %p325 = pneg %p324
      // Predicated region
      $region45: #{tpu_custom_call.1} parent=5 // pred_check
        _
      $region46: #{tpu_custom_call.1} parent=5 // pred_check_branch
        %327 = sbr.rel (%p324) target = $region48
      $region47: #{tpu_custom_call.1} parent=5 // pred_region
        %s328 = ssub.s32 %s21, 1
        %s329 = sand.u32 %s48, 1
        %s330 = scalar_lea.sflag [#allocation4], %s329
        %s331 = sand.u32 %s48, 1
        %s332 = smul.addr %s331, 32
        %s333 = scalar_lea.vmem [#allocation3], %s332
        // Predicated region
        $region49: #{tpu_custom_call.1} parent=47 // pred_check
          %p334 = pneg %p61
        $region50: #{tpu_custom_call.1} parent=47 // pred_check_branch
          %336 = sbr.rel (%p334) target = $region52
        $region51: #{tpu_custom_call.1} parent=47 // pred_region
          %338 = dma.done %s330, 512
        $region52: #{tpu_custom_call.1} parent=47 // pred_fallthru
          _
        // Predicated region
        $region53: #{tpu_custom_call.1} parent=47 // pred_check
          %p339 = pneg %p82
        $region54: #{tpu_custom_call.1} parent=47 // pred_check_branch
          %341 = sbr.rel (%p339) target = $region56
        $region55: #{tpu_custom_call.1} parent=47 // pred_region
          %343 = dma.done [#allocation7], 2048
        $region56: #{tpu_custom_call.1} parent=47 // pred_fallthru
          _
        // Predicated region
        $region57: #{tpu_custom_call.1} parent=47 // pred_check
          %p344 = pneg %p103
        $region58: #{tpu_custom_call.1} parent=47 // pred_check_branch
          %346 = sbr.rel (%p344) target = $region60
        $region59: #{tpu_custom_call.1} parent=47 // pred_region
          %348 = dma.done [#allocation7], 32
        $region60: #{tpu_custom_call.1} parent=47 // pred_fallthru
          _
        // Predicated region
        $region61: #{tpu_custom_call.1} parent=47 // pred_check
          %p349 = pneg %p124
        $region62: #{tpu_custom_call.1} parent=47 // pred_check_branch
          %351 = sbr.rel (%p349) target = $region64
        $region63: #{tpu_custom_call.1} parent=47 // pred_region
          %353 = dma.done [#allocation10], 2048
        $region64: #{tpu_custom_call.1} parent=47 // pred_fallthru
          _
        // Predicated region
        $region65: #{tpu_custom_call.1} parent=47 // pred_check
          %p354 = pneg %p166
        $region66: #{tpu_custom_call.1} parent=47 // pred_check_branch
          %356 = sbr.rel (%p354) target = $region68
        $region67: #{tpu_custom_call.1} parent=47 // pred_region
          %358 = dma.done [#allocation10], 1024
        $region68: #{tpu_custom_call.1} parent=47 // pred_fallthru
          _
        %s359 = sand.u32 %s48, 1
        %s360 = scalar_lea.sflag [#allocation4], %s359
        %s361 = sand.u32 %s48, 1
        %s362 = smul.addr %s361, 32
        %s363 = scalar_lea.vmem [#allocation3], %s362
        %p364 = pneg %p61
        %p365 = pneg %p58
        %p366 = pneg %p82
        %p367 = pneg %p79
        %p368 = pneg %p103
        %p369 = pneg %p100
        %p370 = pneg %p124
        %p371 = pneg %p121
        %p372 = pneg %p145
        %p373 = pneg %p142
        %p374 = pneg %p166
        %p375 = pneg %p163
        %p376 = pneg %p187
        %p377 = pneg %p184
        %p378 = pneg %p213
        %p379 = pneg %p210
        %s380 = sand.u32 %s200, 1
        %s381 = scalar_lea.sflag [#allocation5], %s380
        %s382 = sand.u32 %s200, 1
        %s383 = smul.addr %s382, 32
        %s384 = scalar_lea.vmem [#allocation12], %s383
        %s385 = smul.u32 4, %s30
        %s386 = ssub.s32 5, %s385
        %p387 = scmp.lt.s32.totalorder %s386, 4
        %s388 = scalar_select %p387, %s386, 4
        %s389 = smul.u32 8, %s388
        %s390 = smul.u32 4, %s30
        %s391 = ssub.s32 5, %s390
        %p392 = scmp.lt.s32.totalorder %s391, 4
        %s393 = scalar_select %p392, %s391, 4
        %s394 = smul.u32 8, %s393
        %p395 = scmp.eq.s32.totalorder %s31, 0
        // Predicated region
        $region69: #{tpu_custom_call.1} parent=47 // pred_check
          %p396 = pneg %p395
        $region70: #{tpu_custom_call.1} parent=47 // pred_check_branch
          %398 = sbr.rel (%p396) target = $region72
        $region71: #{tpu_custom_call.1} parent=47 // pred_region
          %399 = vst [vmem:[#allocation2] sm:$0xff] 0.0
          %400 = vst [vmem:[#allocation2 + $0x8] sm:$0xff] 0.0
          %401 = vst [vmem:[#allocation2 + $0x10] sm:$0xff] 0.0
          %402 = vst [vmem:[#allocation2 + $0x18] sm:$0xff] 0.0
          %403 = vst [vmem:[#allocation2 + $0x20] sm:$0xff] 0.0
          %404 = vst [vmem:[#allocation2 + $0x28] sm:$0xff] 0.0
          %405 = vst [vmem:[#allocation2 + $0x30] sm:$0xff] 0.0
          %406 = vst [vmem:[#allocation2 + $0x38] sm:$0xff] 0.0
        $region72: #{tpu_custom_call.1} parent=47 // pred_fallthru
          _
        %v407 = vld [vmem:[#allocation2] sm:$0xff]
        %v408 = vld [vmem:[#allocation2 + $0x8] sm:$0xff]
        %v409 = vld [vmem:[#allocation2 + $0x10] sm:$0xff]
        %v410 = vld [vmem:[#allocation2 + $0x18] sm:$0xff]
        %v411 = vld [vmem:[#allocation2 + $0x20] sm:$0xff]
        %v412 = vld [vmem:[#allocation2 + $0x28] sm:$0xff]
        %v413 = vld [vmem:[#allocation2 + $0x30] sm:$0xff]
        %v414 = vld [vmem:[#allocation2 + $0x38] sm:$0xff]
        %v415 = vld [vmem:[%s333] sm:$0xff]
        %v416 = vld [vmem:[%s333 + $0x8] sm:$0xff]
        %v417 = vld [vmem:[%s333 + $0x10] sm:$0xff]
        %v418 = vld [vmem:[%s333 + $0x18] sm:$0xff]
        %v419 = vpack.c.bf16 %v416, %v415
        %v420 = vpack.c.bf16 %v418, %v417
        %v421 = vld [vmem:[#allocation6] sm:$0xff]
        %v422 = vld [vmem:[#allocation6 + $0x8] sm:$0xff]
        %v423 = vld [vmem:[#allocation6 + $0x10] sm:$0xff]
        %v424 = vld [vmem:[#allocation6 + $0x18] sm:$0xff]
        %v425 = vld [vmem:[#allocation6 + $0x20] sm:$0xff]
        %v426 = vld [vmem:[#allocation6 + $0x28] sm:$0xff]
        %v427 = vld [vmem:[#allocation6 + $0x30] sm:$0xff]
        %v428 = vld [vmem:[#allocation6 + $0x38] sm:$0xff]
        %v429 = vld [vmem:[#allocation6 + $0x40] sm:$0xff]
        %v430 = vld [vmem:[#allocation6 + $0x48] sm:$0xff]
        %v431 = vld [vmem:[#allocation6 + $0x50] sm:$0xff]
        %v432 = vld [vmem:[#allocation6 + $0x58] sm:$0xff]
        %v433 = vld [vmem:[#allocation6 + $0x60] sm:$0xff]
        %v434 = vld [vmem:[#allocation6 + $0x68] sm:$0xff]
        %v435 = vld [vmem:[#allocation6 + $0x70] sm:$0xff]
        %v436 = vld [vmem:[#allocation6 + $0x78] sm:$0xff]
        %v453 = vunpack.c.l.b16 %v421
        %v454 = vunpack.c.h.b16 %v421
        %v455 = vunpack.c.l.b16 %v422
        %v456 = vunpack.c.h.b16 %v422
        %v457 = vunpack.c.l.b16 %v423
        %v458 = vunpack.c.h.b16 %v423
        %v459 = vunpack.c.l.b16 %v424
        %v460 = vunpack.c.h.b16 %v424
        %v461 = vunpack.c.l.b16 %v425
        %v462 = vunpack.c.h.b16 %v425
        %v463 = vunpack.c.l.b16 %v426
        %v464 = vunpack.c.h.b16 %v426
        %v465 = vunpack.c.l.b16 %v427
        %v466 = vunpack.c.h.b16 %v427
        %v467 = vunpack.c.l.b16 %v428
        %v468 = vunpack.c.h.b16 %v428
        %v469 = vunpack.c.l.b16 %v429
        %v470 = vunpack.c.h.b16 %v429
        %v471 = vunpack.c.l.b16 %v430
        %v472 = vunpack.c.h.b16 %v430
        %v473 = vunpack.c.l.b16 %v431
        %v474 = vunpack.c.h.b16 %v431
        %v475 = vunpack.c.l.b16 %v432
        %v476 = vunpack.c.h.b16 %v432
        %v477 = vunpack.c.l.b16 %v433
        %v478 = vunpack.c.h.b16 %v433
        %v479 = vunpack.c.l.b16 %v434
        %v480 = vunpack.c.h.b16 %v434
        %v481 = vunpack.c.l.b16 %v435
        %v482 = vunpack.c.h.b16 %v435
        %v483 = vunpack.c.l.b16 %v436
        %v484 = vunpack.c.h.b16 %v436
        %v485 = vpack.c.b16 %v455, %v453
        %v486 = vpack.c.b16 %v456, %v454
        %v487 = vpack.c.b16 %v459, %v457
        %v488 = vpack.c.b16 %v460, %v458
        %v489 = vpack.c.b16 %v463, %v461
        %v490 = vpack.c.b16 %v464, %v462
        %v491 = vpack.c.b16 %v467, %v465
        %v492 = vpack.c.b16 %v468, %v466
        %v493 = vpack.c.b16 %v471, %v469
        %v494 = vpack.c.b16 %v472, %v470
        %v495 = vpack.c.b16 %v475, %v473
        %v496 = vpack.c.b16 %v476, %v474
        %v497 = vpack.c.b16 %v479, %v477
        %v498 = vpack.c.b16 %v480, %v478
        %v499 = vpack.c.b16 %v483, %v481
        %v500 = vpack.c.b16 %v484, %v482
        %517 = vmatpush.bf16.msra.mxu0 %v499
        %518 = vmatpush.bf16.msra.mxu0 %v497
        %519 = vmatpush.bf16.msra.mxu0 %v495
        %520 = vmatpush.bf16.msra.mxu0 %v493
        %521 = vmatpush.bf16.msra.mxu0 %v491
        %522 = vmatpush.bf16.msra.mxu0 %v489
        %523 = vmatpush.bf16.msra.mxu0 %v487
        %524 = vmatpush.bf16.msra.mxu0 %v485
        %525 = vmatmul.bf16.gmra.mxu0 %v419
        %v526 = vpop.f32.mrf.mxu0
        %v527 = vadd.f32 0.0, %v526
        %v528 = vpop.f32.mrf.mxu0
        %v529 = vadd.f32 0.0, %v528
        %530 = vmatmul.bf16.gmra.mxu0 %v420
        %v531 = vpop.f32.mrf.mxu0
        %v532 = vadd.f32 0.0, %v531
        %v533 = vpop.f32.mrf.mxu0
        %v534 = vadd.f32 0.0, %v533
        %535 = vdwg.mxu0
        %536 = vmatpush.bf16.msra.mxu0 %v500
        %537 = vmatpush.bf16.msra.mxu0 %v498
        %538 = vmatpush.bf16.msra.mxu0 %v496
        %539 = vmatpush.bf16.msra.mxu0 %v494
        %540 = vmatpush.bf16.msra.mxu0 %v492
        %541 = vmatpush.bf16.msra.mxu0 %v490
        %542 = vmatpush.bf16.msra.mxu0 %v488
        %543 = vmatpush.bf16.msra.mxu0 %v486
        %544 = vmatmul.bf16.gmra.mxu0 %v419
        %v545 = vpop.f32.mrf.mxu0
        %v546 = vadd.f32 0.0, %v545
        %v547 = vpop.f32.mrf.mxu0
        %v548 = vadd.f32 0.0, %v547
        %549 = vmatmul.bf16.gmra.mxu0 %v420
        %v550 = vpop.f32.mrf.mxu0
        %v551 = vadd.f32 0.0, %v550
        %v552 = vpop.f32.mrf.mxu0
        %v553 = vadd.f32 0.0, %v552
        %554 = vdwg.mxu0
        %v555 = vadd.f32 %v407, %v527
        %v556 = vadd.f32 %v408, %v546
        %v557 = vadd.f32 %v409, %v529
        %v558 = vadd.f32 %v410, %v548
        %v559 = vadd.f32 %v411, %v532
        %v560 = vadd.f32 %v412, %v551
        %v561 = vadd.f32 %v413, %v534
        %v562 = vadd.f32 %v414, %v553
        %563 = vst [vmem:[#allocation2] sm:$0xff] %v555
        %564 = vst [vmem:[#allocation2 + $0x8] sm:$0xff] %v556
        %565 = vst [vmem:[#allocation2 + $0x10] sm:$0xff] %v557
        %566 = vst [vmem:[#allocation2 + $0x18] sm:$0xff] %v558
        %567 = vst [vmem:[#allocation2 + $0x20] sm:$0xff] %v559
        %568 = vst [vmem:[#allocation2 + $0x28] sm:$0xff] %v560
        %569 = vst [vmem:[#allocation2 + $0x30] sm:$0xff] %v561
        %570 = vst [vmem:[#allocation2 + $0x38] sm:$0xff] %v562
        // Predicated region
        $region73: #{tpu_custom_call.1} parent=47 // pred_check
          %p571 = pneg %p395
        $region74: #{tpu_custom_call.1} parent=47 // pred_check_branch
          %573 = sbr.rel (%p571) target = $region76
        $region75: #{tpu_custom_call.1} parent=47 // pred_region
          %v574 = vld [vmem:[#allocation2] sm:$0xff]
          %v575 = vld [vmem:[#allocation2 + $0x8] sm:$0xff]
          %v576 = vld [vmem:[#allocation2 + $0x10] sm:$0xff]
          %v577 = vld [vmem:[#allocation2 + $0x18] sm:$0xff]
          %v578 = vld [vmem:[#allocation2 + $0x20] sm:$0xff]
          %v579 = vld [vmem:[#allocation2 + $0x28] sm:$0xff]
          %v580 = vld [vmem:[#allocation2 + $0x30] sm:$0xff]
          %v581 = vld [vmem:[#allocation2 + $0x38] sm:$0xff]
          %v582 = vld [vmem:[#allocation8] sm:$0x3]
          %v584 = vperm.slane %v582, 0
          %v585 = vperm.slane %v582, 1
          %v588 = vadd.f32 %v574, %v584
          %v589 = vadd.f32 %v575, %v585
          %v590 = vadd.f32 %v576, %v584
          %v591 = vadd.f32 %v577, %v585
          %v592 = vadd.f32 %v578, %v584
          %v593 = vadd.f32 %v579, %v585
          %v594 = vadd.f32 %v580, %v584
          %v595 = vadd.f32 %v581, %v585
          %v596 = vmax.f32 %v588, 0.0
          %v597 = vmax.f32 %v589, 0.0
          %v598 = vmax.f32 %v590, 0.0
          %v599 = vmax.f32 %v591, 0.0
          %v600 = vmax.f32 %v592, 0.0
          %v601 = vmax.f32 %v593, 0.0
          %v602 = vmax.f32 %v594, 0.0
          %v603 = vmax.f32 %v595, 0.0
          %v604 = vpack.c.bf16 %v598, %v596
          %v605 = vpack.c.bf16 %v599, %v597
          %v606 = vpack.c.bf16 %v602, %v600
          %v607 = vpack.c.bf16 %v603, %v601
          %v608 = vld [vmem:[#allocation9] sm:$0xf]
          %v609 = vld [vmem:[#allocation9 + $0x4] sm:$0xf]
          %v610 = vld [vmem:[#allocation9 + $0x8] sm:$0xf]
          %v611 = vld [vmem:[#allocation9 + $0xc] sm:$0xf]
          %v612 = vld [vmem:[#allocation9 + $0x10] sm:$0xf]
          %v613 = vld [vmem:[#allocation9 + $0x14] sm:$0xf]
          %v614 = vld [vmem:[#allocation9 + $0x18] sm:$0xf]
          %v615 = vld [vmem:[#allocation9 + $0x1c] sm:$0xf]
          %v616 = vld [vmem:[#allocation9 + $0x20] sm:$0xf]
          %v617 = vld [vmem:[#allocation9 + $0x24] sm:$0xf]
          %v618 = vld [vmem:[#allocation9 + $0x28] sm:$0xf]
          %v619 = vld [vmem:[#allocation9 + $0x2c] sm:$0xf]
          %v620 = vld [vmem:[#allocation9 + $0x30] sm:$0xf]
          %v621 = vld [vmem:[#allocation9 + $0x34] sm:$0xf]
          %v622 = vld [vmem:[#allocation9 + $0x38] sm:$0xf]
          %v623 = vld [vmem:[#allocation9 + $0x3c] sm:$0xf]
          %v624 = vld [vmem:[#allocation9 + $0x40] sm:$0xf]
          %v625 = vld [vmem:[#allocation9 + $0x44] sm:$0xf]
          %v626 = vld [vmem:[#allocation9 + $0x48] sm:$0xf]
          %v627 = vld [vmem:[#allocation9 + $0x4c] sm:$0xf]
          %v628 = vld [vmem:[#allocation9 + $0x50] sm:$0xf]
          %v629 = vld [vmem:[#allocation9 + $0x54] sm:$0xf]
          %v630 = vld [vmem:[#allocation9 + $0x58] sm:$0xf]
          %v631 = vld [vmem:[#allocation9 + $0x5c] sm:$0xf]
          %v632 = vld [vmem:[#allocation9 + $0x60] sm:$0xf]
          %v633 = vld [vmem:[#allocation9 + $0x64] sm:$0xf]
          %v634 = vld [vmem:[#allocation9 + $0x68] sm:$0xf]
          %v635 = vld [vmem:[#allocation9 + $0x6c] sm:$0xf]
          %v636 = vld [vmem:[#allocation9 + $0x70] sm:$0xf]
          %v637 = vld [vmem:[#allocation9 + $0x74] sm:$0xf]
          %v638 = vld [vmem:[#allocation9 + $0x78] sm:$0xf]
          %v639 = vld [vmem:[#allocation9 + $0x7c] sm:$0xf]
          %v640 = vld [vmem:[%s4] sm:$0x1]
          %v642 = vperm.slane %v640, 0
          %v676 = vunpack.c.l.b16 %v608
          %v677 = vunpack.c.l.b16 %v609
          %v678 = vunpack.c.l.b16 %v610
          %v679 = vunpack.c.l.b16 %v611
          %v680 = vunpack.c.l.b16 %v612
          %v681 = vunpack.c.l.b16 %v613
          %v682 = vunpack.c.l.b16 %v614
          %v683 = vunpack.c.l.b16 %v615
          %v684 = vunpack.c.l.b16 %v616
          %v685 = vunpack.c.l.b16 %v617
          %v686 = vunpack.c.l.b16 %v618
          %v687 = vunpack.c.l.b16 %v619
          %v688 = vunpack.c.l.b16 %v620
          %v689 = vunpack.c.l.b16 %v621
          %v690 = vunpack.c.l.b16 %v622
          %v691 = vunpack.c.l.b16 %v623
          %v692 = vunpack.c.l.b16 %v624
          %v693 = vunpack.c.l.b16 %v625
          %v694 = vunpack.c.l.b16 %v626
          %v695 = vunpack.c.l.b16 %v627
          %v696 = vunpack.c.l.b16 %v628
          %v697 = vunpack.c.l.b16 %v629
          %v698 = vunpack.c.l.b16 %v630
          %v699 = vunpack.c.l.b16 %v631
          %v700 = vunpack.c.l.b16 %v632
          %v701 = vunpack.c.l.b16 %v633
          %v702 = vunpack.c.l.b16 %v634
          %v703 = vunpack.c.l.b16 %v635
          %v704 = vunpack.c.l.b16 %v636
          %v705 = vunpack.c.l.b16 %v637
          %v706 = vunpack.c.l.b16 %v638
          %v707 = vunpack.c.l.b16 %v639
          %v708 = vpack.c.b16 %v677, %v676
          %v709 = vpack.c.b16 %v679, %v678
          %v710 = vpack.c.b16 %v681, %v680
          %v711 = vpack.c.b16 %v683, %v682
          %v712 = vpack.c.b16 %v685, %v684
          %v713 = vpack.c.b16 %v687, %v686
          %v714 = vpack.c.b16 %v689, %v688
          %v715 = vpack.c.b16 %v691, %v690
          %v716 = vpack.c.b16 %v693, %v692
          %v717 = vpack.c.b16 %v695, %v694
          %v718 = vpack.c.b16 %v697, %v696
          %v719 = vpack.c.b16 %v699, %v698
          %v720 = vpack.c.b16 %v701, %v700
          %v721 = vpack.c.b16 %v703, %v702
          %v722 = vpack.c.b16 %v705, %v704
          %v723 = vpack.c.b16 %v707, %v706
          %740 = vmatpush.bf16.msra.mxu0 %v715
          %741 = vmatpush.bf16.msra.mxu0 %v714
          %742 = vmatpush.bf16.msra.mxu0 %v713
          %743 = vmatpush.bf16.msra.mxu0 %v712
          %744 = vmatpush.bf16.msra.mxu0 %v711
          %745 = vmatpush.bf16.msra.mxu0 %v710
          %746 = vmatpush.bf16.msra.mxu0 %v709
          %747 = vmatpush.bf16.msra.mxu0 %v708
          %748 = vmatmul.bf16.gmra.mxu0 %v604
          %v749 = vpop.f32.mrf.mxu0
          %v750 = vadd.f32 %v642, %v749
          %v751 = vpop.f32.mrf.mxu0
          %v752 = vadd.f32 %v642, %v751
          %753 = vmatmul.bf16.gmra.mxu0 %v606
          %v754 = vpop.f32.mrf.mxu0
          %v755 = vadd.f32 %v642, %v754
          %v756 = vpop.f32.mrf.mxu0
          %v757 = vadd.f32 %v642, %v756
          %758 = vdwg.mxu0
          %759 = vmatpush.bf16.msra.mxu0 %v723
          %760 = vmatpush.bf16.msra.mxu0 %v722
          %761 = vmatpush.bf16.msra.mxu0 %v721
          %762 = vmatpush.bf16.msra.mxu0 %v720
          %763 = vmatpush.bf16.msra.mxu0 %v719
          %764 = vmatpush.bf16.msra.mxu0 %v718
          %765 = vmatpush.bf16.msra.mxu0 %v717
          %766 = vmatpush.bf16.msra.mxu0 %v716
          %767 = vmatmul.bf16.gmra.mxu0 %v605
          %v768 = vpop.f32.mrf.mxu0
          %v769 = vadd.f32 %v750, %v768
          %v770 = vpop.f32.mrf.mxu0
          %v771 = vadd.f32 %v752, %v770
          %772 = vmatmul.bf16.gmra.mxu0 %v607
          %v773 = vpop.f32.mrf.mxu0
          %v774 = vadd.f32 %v755, %v773
          %v775 = vpop.f32.mrf.mxu0
          %v776 = vadd.f32 %v757, %v775
          %777 = vdwg.mxu0
          %v778 = vmax.f32 %v769, 0.0
          %v779 = vmax.f32 %v771, 0.0
          %v780 = vmax.f32 %v774, 0.0
          %v781 = vmax.f32 %v776, 0.0
          %v782 = vpack.c.bf16 %v779, %v778
          %v783 = vpack.c.bf16 %v781, %v780
          %v784 = vld [vmem:[#allocation11] sm:$0xf]
          %v785 = vld [vmem:[#allocation11 + $0x4] sm:$0xf]
          %v786 = vld [vmem:[#allocation11 + $0x8] sm:$0xf]
          %v787 = vld [vmem:[#allocation11 + $0xc] sm:$0xf]
          %v788 = vld [vmem:[#allocation11 + $0x10] sm:$0xf]
          %v789 = vld [vmem:[#allocation11 + $0x14] sm:$0xf]
          %v790 = vld [vmem:[#allocation11 + $0x18] sm:$0xf]
          %v791 = vld [vmem:[#allocation11 + $0x1c] sm:$0xf]
          %v792 = vld [vmem:[#allocation11 + $0x20] sm:$0xf]
          %v793 = vld [vmem:[#allocation11 + $0x24] sm:$0xf]
          %v794 = vld [vmem:[#allocation11 + $0x28] sm:$0xf]
          %v795 = vld [vmem:[#allocation11 + $0x2c] sm:$0xf]
          %v796 = vld [vmem:[#allocation11 + $0x30] sm:$0xf]
          %v797 = vld [vmem:[#allocation11 + $0x34] sm:$0xf]
          %v798 = vld [vmem:[#allocation11 + $0x38] sm:$0xf]
          %v799 = vld [vmem:[#allocation11 + $0x3c] sm:$0xf]
          %v800 = vld [vmem:[%s6] sm:$0x1]
          %v802 = vperm.slane %v800, 0
          %v820 = vunpack.c.l.b16 %v784
          %v821 = vunpack.c.l.b16 %v785
          %v822 = vunpack.c.l.b16 %v786
          %v823 = vunpack.c.l.b16 %v787
          %v824 = vunpack.c.l.b16 %v788
          %v825 = vunpack.c.l.b16 %v789
          %v826 = vunpack.c.l.b16 %v790
          %v827 = vunpack.c.l.b16 %v791
          %v828 = vunpack.c.l.b16 %v792
          %v829 = vunpack.c.l.b16 %v793
          %v830 = vunpack.c.l.b16 %v794
          %v831 = vunpack.c.l.b16 %v795
          %v832 = vunpack.c.l.b16 %v796
          %v833 = vunpack.c.l.b16 %v797
          %v834 = vunpack.c.l.b16 %v798
          %v835 = vunpack.c.l.b16 %v799
          %v836 = vpack.c.b16 %v821, %v820
          %v837 = vpack.c.b16 %v823, %v822
          %v838 = vpack.c.b16 %v825, %v824
          %v839 = vpack.c.b16 %v827, %v826
          %v840 = vpack.c.b16 %v829, %v828
          %v841 = vpack.c.b16 %v831, %v830
          %v842 = vpack.c.b16 %v833, %v832
          %v843 = vpack.c.b16 %v835, %v834
          %852 = vmatpush.bf16.msra.mxu0 %v843
          %853 = vmatpush.bf16.msra.mxu0 %v842
          %854 = vmatpush.bf16.msra.mxu0 %v841
          %855 = vmatpush.bf16.msra.mxu0 %v840
          %856 = vmatpush.bf16.msra.mxu0 %v839
          %857 = vmatpush.bf16.msra.mxu0 %v838
          %858 = vmatpush.bf16.msra.mxu0 %v837
          %859 = vmatpush.bf16.msra.mxu0 %v836
          %860 = vmatmul.bf16.gmra.mxu0 %v782
          %v861 = vpop.f32.mrf.mxu0
          %v862 = vadd.f32 %v802, %v861
          %v863 = vpop.f32.mrf.mxu0
          %v864 = vadd.f32 %v802, %v863
          %865 = vmatmul.bf16.gmra.mxu0 %v783
          %v866 = vpop.f32.mrf.mxu0
          %v867 = vadd.f32 %v802, %v866
          %v868 = vpop.f32.mrf.mxu0
          %v869 = vadd.f32 %v802, %v868
          %870 = vdwg.mxu0
          %871 = vst [vmem:[%s384] sm:$0xff] %v862
          %872 = vst [vmem:[%s384 + $0x8] sm:$0xff] %v864
          %873 = vst [vmem:[%s384 + $0x10] sm:$0xff] %v867
          %874 = vst [vmem:[%s384 + $0x18] sm:$0xff] %v869
        $region76: #{tpu_custom_call.1} parent=47 // pred_fallthru
          _
        %s875 = sand.u32 %s200, 1
        %s876 = scalar_lea.sflag [#allocation5], %s875
        %s877 = sand.u32 %s200, 1
        %s878 = smul.addr %s877, 32
        %s879 = scalar_lea.vmem [#allocation12], %s878
        // Predicated region
        $region77: #{tpu_custom_call.1} parent=47 // pred_check
          %p880 = pneg %p210
        $region78: #{tpu_custom_call.1} parent=47 // pred_check_branch
          %882 = sbr.rel (%p880) target = $region80
        $region79: #{tpu_custom_call.1} parent=47 // pred_region
          %s883 = smul.u32 4, %s30
          %s884 = ssub.s32 5, %s883
          %p885 = scmp.lt.s32.totalorder %s884, 4
          %s886 = scalar_select %p885, %s884, 4
          %s887 = smul.u32 8, %s886
          %s888 = ssub.s32 32, %s887
          %s889 = sshll.u32 %s888, 4
          %890 = vsyncadd %s876, %s889
          %p891 = scmp.ne.s32.totalorder 0, %s887
          %s892 = smul.addr %s883, 8
          %s893 = scalar_lea.hbm %s7, %s892
          %s894 = smul.u32 8, %s886
          %s895 = sshll.u32 %s879, 4
          %s896 = int_to_ptr.vmem [resolvable:$true] %s895
          %s897 = sshll.u32 %s893, 4
          %s898 = int_to_ptr.hbm [resolvable:$true] %s897
          %s899 = sshll.u32 %s894, 4
          %903 = dma.vmem_to_hbm [thread:$0]  (%p891), %s896, %s899, %s898, %s876, 128, 128, 8
        $region80: #{tpu_custom_call.1} parent=47 // pred_fallthru
          _
      $region48: #{tpu_custom_call.1} parent=5 // pred_fallthru
        _
      %p904 = scmp.le.s32.totalorder 2, %s21
      // Predicated region
      $region81: #{tpu_custom_call.1} parent=5 // pred_check
        %p905 = pneg %p904
      $region82: #{tpu_custom_call.1} parent=5 // pred_check_branch
        %907 = sbr.rel (%p905) target = $region84
      $region83: #{tpu_custom_call.1} parent=5 // pred_region
        %s908 = ssub.s32 %s21, 2
        // Predicated region
        $region85: #{tpu_custom_call.1} parent=83 // pred_check
          %p909 = pneg %p216
        $region86: #{tpu_custom_call.1} parent=83 // pred_check_branch
          %911 = sbr.rel (%p909) target = $region88
        $region87: #{tpu_custom_call.1} parent=83 // pred_region
          %s912 = sand.u32 %s201, 1
          %s913 = scalar_lea.sflag [#allocation5], %s912
          %s914 = sand.u32 %s201, 1
          %s915 = smul.addr %s914, 32
          %s916 = scalar_lea.vmem [#allocation12], %s915
          %918 = dma.done %s913, 512
        $region88: #{tpu_custom_call.1} parent=83 // pred_fallthru
          _
      $region84: #{tpu_custom_call.1} parent=5 // pred_fallthru
        _
    $region6: #{tpu_custom_call.1} parent=1 // loop_footer
      %s25 = sadd.s32 1, %s21
    $region7: #{tpu_custom_call.1} parent=1 // loop_footer_branch
      %20 = sbr.rel target = $region3
    $region8: #{tpu_custom_call.1} parent=1 // loop_exit
      _
    %919 = vsyncpa [#allocation4], 1
    %s920 = scalar_lea.sflag [#allocation4], 1
    %921 = vsyncpa %s920, 1
    %922 = vsyncpa [#allocation7], 1
    %923 = vsyncpa [#allocation10], 1
    %924 = vsyncpa [#allocation5], 1
    %s925 = scalar_lea.sflag [#allocation5], 1
    %926 = vsyncpa %s925, 1

// kernel: tpu_custom_call.1
$region0: #{tpu_custom_call.1}
  #allocation0 [shape = 'u32[]', space=smem, size = 0x4, offset = 0x4, fixed_abs, tag = 'smem constant byte address 0x4 - core index']
  #allocation1 [shape = 'u32[72,128]{1,0:T(1,128)}', space=vmem, size = 0x9000, scoped, tag = 'internal scratch']
  #allocation2 [shape = 'f32[32,256]{1,0:T(8,128)}', space=vmem, size = 0x8000, scoped, tag = 'scratch operand']
  %s0 = inlined_call_operand.hbm [shape: f32[40,128], index: 0, kind: input, shape index: {}]
  %s1 = inlined_call_operand.hbm [shape: bf16[128,256], index: 1, kind: input, shape index: {}]
  %s2 = inlined_call_operand.hbm [shape: f32[1,256], index: 2, kind: input, shape index: {}]
  %s3 = inlined_call_operand.hbm [shape: bf16[256,128], index: 3, kind: input, shape index: {}]
  %s4 = inlined_call_operand.vmem [shape: f32[1,128], index: 4, kind: input, shape index: {}]
  %s5 = inlined_call_operand.hbm [shape: bf16[128,128], index: 5, kind: input, shape index: {}]
  %s6 = inlined_call_operand.vmem [shape: f32[1,128], index: 6, kind: input, shape index: {}]
  %s7 = inlined_call_operand.hbm [shape: f32[40,128], index: 7, kind: output, shape index: {}]
  %s8 = sld [smem:[#allocation0]]
  $region89: #{tpu_custom_call.1} parent=0
    _
  %s10 = ssub.s32 1, %s8
  %s11 = scalar_select 0, %s10, %s8
  $region1: #{tpu_custom_call.1} parent=0
    #allocation3 [shape = 'u8[32768]{0}', space=vmem, size = 0x8000, scoped, tag = 'input window, operand 0']
    #allocation4 [shape = 's32[2]{0}', space=sflag, size = 0x8, scoped, tag = 'scoped memory for tpu_custom_call.1']
    #allocation5 [shape = 's32[2]{0}', space=sflag, size = 0x8, scoped, tag = 'scoped memory for tpu_custom_call.1']
    #allocation6 [shape = 'u8[65536]{0}', space=vmem, size = 0x10000, scoped, tag = 'input window, operand 1, single buffered']
    #allocation7 [shape = 's32[1]{0}', space=sflag, size = 0x4, scoped, tag = 'scoped memory for tpu_custom_call.1']
    #allocation8 [shape = 'u8[1024]{0}', space=vmem, size = 0x400, scoped, tag = 'input window, operand 2, single buffered']
    #allocation9 [shape = 'u8[65536]{0}', space=vmem, size = 0x10000, scoped, tag = 'input window, operand 3, single buffered']
    #allocation10 [shape = 's32[1]{0}', space=sflag, size = 0x4, scoped, tag = 'scoped memory for tpu_custom_call.1']
    #allocation11 [shape = 'u8[32768]{0}', space=vmem, size = 0x8000, scoped, tag = 'input window, operand 5, single buffered']
    #allocation12 [shape = 'u8[32768]{0}', space=vmem, size = 0x8000, scoped, tag = 'output window, operand 0']
    %12 = vsyncpa [#allocation4], 0
    %s13 = scalar_lea.sflag [#allocation4], 1
    %14 = vsyncpa %s13, 0
    %15 = vsyncpa [#allocation7], 0
    %16 = vsyncpa [#allocation10], 0
    %17 = vsyncpa [#allocation5], 0
    %s18 = scalar_lea.sflag [#allocation5], 1
    %19 = vsyncpa %s18, 0
    loop: start=0, step=1, limit=4
    $region2: #{tpu_custom_call.1} parent=1 // loop_pre_header
      _
    $region3: #{tpu_custom_call.1} parent=1 // loop_header
      %s21 = sphi 0, %s25
      %p22 = scmp.ge.s32.totalorder %s21, 4
      %s28 = sphi 0, %s40
      %s29 = sphi 0, %s36
      %s30 = sphi 0, %s28
      %s31 = sphi 0, %s29
      %s32 = sphi 0, %s30
      %s33 = sphi 0, %s31
      %s45 = sphi 0, %s47
      %s48 = sphi 0, %s45
      %s49 = sphi 0, %s48
      %s65 = sphi 0, %s49
      %s69 = sphi 0, %s69
      %s71 = sphi 0, %s69
      %s72 = sphi 0, %s71
      %s86 = sphi 0, %s72
      %s90 = sphi 0, %s90
      %s92 = sphi 0, %s90
      %s93 = sphi 0, %s92
      %s107 = sphi 0, %s93
      %s111 = sphi 0, %s111
      %s113 = sphi 0, %s111
      %s114 = sphi 0, %s113
      %s128 = sphi 0, %s114
      %s132 = sphi 0, %s132
      %s134 = sphi 0, %s132
      %s135 = sphi 0, %s134
      %s149 = sphi 0, %s135
      %s153 = sphi 0, %s153
      %s155 = sphi 0, %s153
      %s156 = sphi 0, %s155
      %s170 = sphi 0, %s156
      %s174 = sphi 0, %s174
      %s176 = sphi 0, %s174
      %s177 = sphi 0, %s176
      %s191 = sphi 0, %s177
      %s197 = sphi 0, %s199
      %s200 = sphi 0, %s197
      %s201 = sphi 0, %s200
      %s217 = sphi 0, %s201
    $region4: #{tpu_custom_call.1} parent=1 // loop_header_branch
      %24 = sbr.rel (%p22) target = $region8
    $region5: #{tpu_custom_call.1} parent=1 // loop_body
      %s26 = ssub.s32 %s21, 1
      %s27 = ssub.s32 %s21, 2
      %s34 = sadd.s32 1, %s29
      %p35 = scmp.ge.s32.totalorder %s34, 1
      %s36 = scalar_select %p35, 0, %s34
      %s37 = sadd.s32 1, %s28
      %s38 = scalar_select %p35, %s37, %s28
      %p39 = scmp.ge.s32.totalorder %s38, 2
      %s40 = scalar_select %p39, 0, %s38
      %s41 = ssub.s32 %s28, %s40
      %s42 = ssub.s32 %s29, %s36
      %s43 = sor.u32 %s41, %s42
      %p44 = scmp.eq.s32.totalorder %s43, 0
      %s46 = sadd.s32 %s45, 1
      %s47 = scalar_select %p44, %s45, %s46
      %p50 = pneg %p44
      %p51 = scmp.eq.s32.totalorder %s21, 1
      %p52 = por %p50, %p51
      %p53 = scmp.ne.s32.totalorder %s45, %s48
      %p54 = scmp.eq.s32.totalorder %s21, 0
      %p55 = por %p53, %p54
      %p56 = scmp.ne.s32.totalorder %s45, %s48
      %p57 = scmp.eq.s32.totalorder %s26, 1
      %p58 = por %p56, %p57
      %p59 = scmp.ne.s32.totalorder %s48, %s49
      %p60 = scmp.eq.s32.totalorder %s26, 0
      %p61 = por %p59, %p60
      %p62 = scmp.ne.s32.totalorder %s48, %s49
      %p63 = scmp.eq.s32.totalorder %s27, 1
      %p64 = por %p62, %p63
      %p66 = scmp.ne.s32.totalorder %s49, %s65
      %p67 = scmp.eq.s32.totalorder %s27, 0
      %p68 = por %p66, %p67
      %s70 = sadd.s32 %s69, 1
      %p73 = scmp.eq.s32.totalorder %s21, 1
      %p74 = scmp.ne.s32.totalorder %s69, %s71
      %p75 = scmp.eq.s32.totalorder %s21, 0
      %p76 = por %p74, %p75
      %p77 = scmp.ne.s32.totalorder %s69, %s71
      %p78 = scmp.eq.s32.totalorder %s26, 1
      %p79 = por %p77, %p78
      %p80 = scmp.ne.s32.totalorder %s71, %s72
      %p81 = scmp.eq.s32.totalorder %s26, 0
      %p82 = por %p80, %p81
      %p83 = scmp.ne.s32.totalorder %s71, %s72
      %p84 = scmp.eq.s32.totalorder %s27, 1
      %p85 = por %p83, %p84
      %p87 = scmp.ne.s32.totalorder %s72, %s86
      %p88 = scmp.eq.s32.totalorder %s27, 0
      %p89 = por %p87, %p88
      %s91 = sadd.s32 %s90, 1
      %p94 = scmp.eq.s32.totalorder %s21, 1
      %p95 = scmp.ne.s32.totalorder %s90, %s92
      %p96 = scmp.eq.s32.totalorder %s21, 0
      %p97 = por %p95, %p96
      %p98 = scmp.ne.s32.totalorder %s90, %s92
      %p99 = scmp.eq.s32.totalorder %s26, 1
      %p100 = por %p98, %p99
      %p101 = scmp.ne.s32.totalorder %s92, %s93
      %p102 = scmp.eq.s32.totalorder %s26, 0
      %p103 = por %p101, %p102
      %p104 = scmp.ne.s32.totalorder %s92, %s93
      %p105 = scmp.eq.s32.totalorder %s27, 1
      %p106 = por %p104, %p105
      %p108 = scmp.ne.s32.totalorder %s93, %s107
      %p109 = scmp.eq.s32.totalorder %s27, 0
      %p110 = por %p108, %p109
      %s112 = sadd.s32 %s111, 1
      %p115 = scmp.eq.s32.totalorder %s21, 1
      %p116 = scmp.ne.s32.totalorder %s111, %s113
      %p117 = scmp.eq.s32.totalorder %s21, 0
      %p118 = por %p116, %p117
      %p119 = scmp.ne.s32.totalorder %s111, %s113
      %p120 = scmp.eq.s32.totalorder %s26, 1
      %p121 = por %p119, %p120
      %p122 = scmp.ne.s32.totalorder %s113, %s114
      %p123 = scmp.eq.s32.totalorder %s26, 0
      %p124 = por %p122, %p123
      %p125 = scmp.ne.s32.totalorder %s113, %s114
      %p126 = scmp.eq.s32.totalorder %s27, 1
      %p127 = por %p125, %p126
      %p129 = scmp.ne.s32.totalorder %s114, %s128
      %p130 = scmp.eq.s32.totalorder %s27, 0
      %p131 = por %p129, %p130
      %s133 = sadd.s32 %s132, 1
      %p136 = scmp.eq.s32.totalorder %s21, 1
      %p137 = scmp.ne.s32.totalorder %s132, %s134
      %p138 = scmp.eq.s32.totalorder %s21, 0
      %p139 = por %p137, %p138
      %p140 = scmp.ne.s32.totalorder %s132, %s134
      %p141 = scmp.eq.s32.totalorder %s26, 1
      %p142 = por %p140, %p141
      %p143 = scmp.ne.s32.totalorder %s134, %s135
      %p144 = scmp.eq.s32.totalorder %s26, 0
      %p145 = por %p143, %p144
      %p146 = scmp.ne.s32.totalorder %s134, %s135
      %p147 = scmp.eq.s32.totalorder %s27, 1
      %p148 = por %p146, %p147
      %p150 = scmp.ne.s32.totalorder %s135, %s149
      %p151 = scmp.eq.s32.totalorder %s27, 0
      %p152 = por %p150, %p151
      %s154 = sadd.s32 %s153, 1
      %p157 = scmp.eq.s32.totalorder %s21, 1
      %p158 = scmp.ne.s32.totalorder %s153, %s155
      %p159 = scmp.eq.s32.totalorder %s21, 0
      %p160 = por %p158, %p159
      %p161 = scmp.ne.s32.totalorder %s153, %s155
      %p162 = scmp.eq.s32.totalorder %s26, 1
      %p163 = por %p161, %p162
      %p164 = scmp.ne.s32.totalorder %s155, %s156
      %p165 = scmp.eq.s32.totalorder %s26, 0
      %p166 = por %p164, %p165
      %p167 = scmp.ne.s32.totalorder %s155, %s156
      %p168 = scmp.eq.s32.totalorder %s27, 1
      %p169 = por %p167, %p168
      %p171 = scmp.ne.s32.totalorder %s156, %s170
      %p172 = scmp.eq.s32.totalorder %s27, 0
      %p173 = por %p171, %p172
      %s175 = sadd.s32 %s174, 1
      %p178 = scmp.eq.s32.totalorder %s21, 1
      %p179 = scmp.ne.s32.totalorder %s174, %s176
      %p180 = scmp.eq.s32.totalorder %s21, 0
      %p181 = por %p179, %p180
      %p182 = scmp.ne.s32.totalorder %s174, %s176
      %p183 = scmp.eq.s32.totalorder %s26, 1
      %p184 = por %p182, %p183
      %p185 = scmp.ne.s32.totalorder %s176, %s177
      %p186 = scmp.eq.s32.totalorder %s26, 0
      %p187 = por %p185, %p186
      %p188 = scmp.ne.s32.totalorder %s176, %s177
      %p189 = scmp.eq.s32.totalorder %s27, 1
      %p190 = por %p188, %p189
      %p192 = scmp.ne.s32.totalorder %s177, %s191
      %p193 = scmp.eq.s32.totalorder %s27, 0
      %p194 = por %p192, %p193
      %s195 = ssub.s32 %s28, %s40
      %p196 = scmp.eq.s32.totalorder %s195, 0
      %s198 = sadd.s32 %s197, 1
      %s199 = scalar_select %p196, %s197, %s198
      %p202 = pneg %p196
      %p203 = scmp.eq.s32.totalorder %s21, 1
      %p204 = por %p202, %p203
      %p205 = scmp.ne.s32.totalorder %s197, %s200
      %p206 = scmp.eq.s32.totalorder %s21, 0
      %p207 = por %p205, %p206
      %p208 = scmp.ne.s32.totalorder %s197, %s200
      %p209 = scmp.eq.s32.totalorder %s26, 1
      %p210 = por %p208, %p209
      %p211 = scmp.ne.s32.totalorder %s200, %s201
      %p212 = scmp.eq.s32.totalorder %s26, 0
      %p213 = por %p211, %p212
      %p214 = scmp.ne.s32.totalorder %s200, %s201
      %p215 = scmp.eq.s32.totalorder %s27, 1
      %p216 = por %p214, %p215
      %p218 = scmp.ne.s32.totalorder %s201, %s217
      %p219 = scmp.eq.s32.totalorder %s27, 0
      %p220 = por %p218, %p219
      %p221 = scmp.le.s32.totalorder 1, %s21
      %p222 = scmp.lt.s32.totalorder %s21, 3
      %p223 = pnand %p221, %p222
      %p224 = pneg %p223
      // Predicated region
      $region9: #{tpu_custom_call.1} parent=5 // pred_check
        _
      $region10: #{tpu_custom_call.1} parent=5 // pred_check_branch
        %226 = sbr.rel (%p223) target = $region12
      $region11: #{tpu_custom_call.1} parent=5 // pred_region
        %s227 = ssub.s32 %s21, 1
        // Predicated region
        $region13: #{tpu_custom_call.1} parent=11 // pred_check
          %p228 = pneg %p82
        $region14: #{tpu_custom_call.1} parent=11 // pred_check_branch
          %230 = sbr.rel (%p228) target = $region16
        $region15: #{tpu_custom_call.1} parent=11 // pred_region
          %232 = vsyncadd [#allocation7], 0
          %s233 = sshll.u32 %s1, 4
          %s234 = int_to_ptr.hbm [resolvable:$true] %s233
          %s235 = sshll.u32 [#allocation6], 4
          %s236 = int_to_ptr.vmem [resolvable:$true] %s235
          %241 = dma.hbm_to_vmem [thread:$0]  %s234, 2048, %s236, [#allocation7], 128, 128, 8
        $region16: #{tpu_custom_call.1} parent=11 // pred_fallthru
          _
        // Predicated region
        $region17: #{tpu_custom_call.1} parent=11 // pred_check
          %p242 = pneg %p103
        $region18: #{tpu_custom_call.1} parent=11 // pred_check_branch
          %244 = sbr.rel (%p242) target = $region20
        $region19: #{tpu_custom_call.1} parent=11 // pred_region
          %246 = vsyncadd [#allocation7], 0
          %s248 = sshll.u32 %s2, 4
          %s249 = int_to_ptr.hbm [resolvable:$true] %s248
          %s250 = sshll.u32 [#allocation8], 4
          %s251 = int_to_ptr.vmem [resolvable:$true] %s250
          %253 = dma.hbm_to_vmem [thread:$0]  %s249, 32, %s251, [#allocation7]
        $region20: #{tpu_custom_call.1} parent=11 // pred_fallthru
          _
        // Predicated region
        $region21: #{tpu_custom_call.1} parent=11 // pred_check
          %p254 = pneg %p124
        $region22: #{tpu_custom_call.1} parent=11 // pred_check_branch
          %256 = sbr.rel (%p254) target = $region24
        $region23: #{tpu_custom_call.1} parent=11 // pred_region
          %258 = vsyncadd [#allocation10], 0
          %s259 = sshll.u32 %s3, 4
          %s260 = int_to_ptr.hbm [resolvable:$true] %s259
          %s261 = sshll.u32 [#allocation9], 4
          %s262 = int_to_ptr.vmem [resolvable:$true] %s261
          %267 = dma.hbm_to_vmem [thread:$0]  %s260, 2048, %s262, [#allocation10], 64, 64, 4
        $region24: #{tpu_custom_call.1} parent=11 // pred_fallthru
          _
        // Predicated region
        $region25: #{tpu_custom_call.1} parent=11 // pred_check
          %p268 = pneg %p145
        $region26: #{tpu_custom_call.1} parent=11 // pred_check_branch
          %270 = sbr.rel (%p268) target = $region28
        $region27: #{tpu_custom_call.1} parent=11 // pred_region
          _
        $region28: #{tpu_custom_call.1} parent=11 // pred_fallthru
          _
        // Predicated region
        $region29: #{tpu_custom_call.1} parent=11 // pred_check
          %p271 = pneg %p166
        $region30: #{tpu_custom_call.1} parent=11 // pred_check_branch
          %273 = sbr.rel (%p271) target = $region32
        $region31: #{tpu_custom_call.1} parent=11 // pred_region
          %275 = vsyncadd [#allocation10], 0
          %s276 = sshll.u32 %s5, 4
          %s277 = int_to_ptr.hbm [resolvable:$true] %s276
          %s278 = sshll.u32 [#allocation11], 4
          %s279 = int_to_ptr.vmem [resolvable:$true] %s278
          %284 = dma.hbm_to_vmem [thread:$0]  %s277, 1024, %s279, [#allocation10], 64, 64, 4
        $region32: #{tpu_custom_call.1} parent=11 // pred_fallthru
          _
        // Predicated region
        $region33: #{tpu_custom_call.1} parent=11 // pred_check
          %p285 = pneg %p187
        $region34: #{tpu_custom_call.1} parent=11 // pred_check_branch
          %287 = sbr.rel (%p285) target = $region36
        $region35: #{tpu_custom_call.1} parent=11 // pred_region
          _
        $region36: #{tpu_custom_call.1} parent=11 // pred_fallthru
          _
      $region12: #{tpu_custom_call.1} parent=5 // pred_fallthru
        _
      %p288 = scmp.lt.s32.totalorder %s21, 2
      // Predicated region
      $region37: #{tpu_custom_call.1} parent=5 // pred_check
        %p289 = pneg %p288
      $region38: #{tpu_custom_call.1} parent=5 // pred_check_branch
        %291 = sbr.rel (%p289) target = $region40
      $region39: #{tpu_custom_call.1} parent=5 // pred_region
        // Predicated region
        $region41: #{tpu_custom_call.1} parent=39 // pred_check
          %p292 = pneg %p55
        $region42: #{tpu_custom_call.1} parent=39 // pred_check_branch
          %294 = sbr.rel (%p292) target = $region44
        $region43: #{tpu_custom_call.1} parent=39 // pred_region
          %s295 = sand.u32 %s45, 1
          %s296 = scalar_lea.sflag [#allocation4], %s295
          %s297 = sand.u32 %s45, 1
          %s298 = smul.addr %s297, 32
          %s299 = scalar_lea.vmem [#allocation3], %s298
          %s300 = smul.u32 4, %s28
          %s301 = ssub.s32 5, %s300
          %p302 = scmp.lt.s32.totalorder %s301, 4
          %s303 = scalar_select %p302, %s301, 4
          %s304 = smul.u32 8, %s303
          %s305 = ssub.s32 32, %s304
          %s306 = sshll.u32 %s305, 4
          %307 = vsyncadd %s296, %s306
          %p308 = scmp.ne.s32.totalorder 0, %s304
          %s309 = sadd.s32 %s29, %s300
          %s310 = smul.addr %s309, 8
          %s311 = scalar_lea.hbm %s0, %s310
          %s312 = smul.u32 8, %s303
          %s313 = sshll.u32 %s311, 4
          %s314 = int_to_ptr.hbm [resolvable:$true] %s313
          %s315 = sshll.u32 %s299, 4
          %s316 = int_to_ptr.vmem [resolvable:$true] %s315
          %s317 = sshll.u32 %s312, 4
          %321 = dma.hbm_to_vmem [thread:$0]  (%p308), %s314, %s317, %s316, %s296, 128, 128, 8
        $region44: #{tpu_custom_call.1} parent=39 // pred_fallthru
          _
      $region40: #{tpu_custom_call.1} parent=5 // pred_fallthru
        _
      %p322 = scmp.le.s32.totalorder 1, %s21
      %p323 = scmp.lt.s32.totalorder %s21, 3
      %p324 = pnand %p322, %p323
      %p325 = pneg %p324
      // Predicated region
      $region45: #{tpu_custom_call.1} parent=5 // pred_check
        _
      $region46: #{tpu_custom_call.1} parent=5 // pred_check_branch
        %327 = sbr.rel (%p324) target = $region48
      $region47: #{tpu_custom_call.1} parent=5 // pred_region
        %s328 = ssub.s32 %s21, 1
        %s329 = sand.u32 %s48, 1
        %s330 = scalar_lea.sflag [#allocation4], %s329
        %s331 = sand.u32 %s48, 1
        %s332 = smul.addr %s331, 32
        %s333 = scalar_lea.vmem [#allocation3], %s332
        // Predicated region
        $region49: #{tpu_custom_call.1} parent=47 // pred_check
          %p334 = pneg %p61
        $region50: #{tpu_custom_call.1} parent=47 // pred_check_branch
          %336 = sbr.rel (%p334) target = $region52
        $region51: #{tpu_custom_call.1} parent=47 // pred_region
          %338 = dma.done %s330, 512
        $region52: #{tpu_custom_call.1} parent=47 // pred_fallthru
          _
        // Predicated region
        $region53: #{tpu_custom_call.1} parent=47 // pred_check
          %p339 = pneg %p82
        $region54: #{tpu_custom_call.1} parent=47 // pred_check_branch
          %341 = sbr.rel (%p339) target = $region56
        $region55: #{tpu_custom_call.1} parent=47 // pred_region
          %343 = dma.done [#allocation7], 2048
        $region56: #{tpu_custom_call.1} parent=47 // pred_fallthru
          _
        // Predicated region
        $region57: #{tpu_custom_call.1} parent=47 // pred_check
          %p344 = pneg %p103
        $region58: #{tpu_custom_call.1} parent=47 // pred_check_branch
          %346 = sbr.rel (%p344) target = $region60
        $region59: #{tpu_custom_call.1} parent=47 // pred_region
          %348 = dma.done [#allocation7], 32
        $region60: #{tpu_custom_call.1} parent=47 // pred_fallthru
          _
        // Predicated region
        $region61: #{tpu_custom_call.1} parent=47 // pred_check
          %p349 = pneg %p124
        $region62: #{tpu_custom_call.1} parent=47 // pred_check_branch
          %351 = sbr.rel (%p349) target = $region64
        $region63: #{tpu_custom_call.1} parent=47 // pred_region
          %353 = dma.done [#allocation10], 2048
        $region64: #{tpu_custom_call.1} parent=47 // pred_fallthru
          _
        // Predicated region
        $region65: #{tpu_custom_call.1} parent=47 // pred_check
          %p354 = pneg %p166
        $region66: #{tpu_custom_call.1} parent=47 // pred_check_branch
          %356 = sbr.rel (%p354) target = $region68
        $region67: #{tpu_custom_call.1} parent=47 // pred_region
          %358 = dma.done [#allocation10], 1024
        $region68: #{tpu_custom_call.1} parent=47 // pred_fallthru
          _
        %s359 = sand.u32 %s48, 1
        %s360 = scalar_lea.sflag [#allocation4], %s359
        %s361 = sand.u32 %s48, 1
        %s362 = smul.addr %s361, 32
        %s363 = scalar_lea.vmem [#allocation3], %s362
        %p364 = pneg %p61
        %p365 = pneg %p58
        %p366 = pneg %p82
        %p367 = pneg %p79
        %p368 = pneg %p103
        %p369 = pneg %p100
        %p370 = pneg %p124
        %p371 = pneg %p121
        %p372 = pneg %p145
        %p373 = pneg %p142
        %p374 = pneg %p166
        %p375 = pneg %p163
        %p376 = pneg %p187
        %p377 = pneg %p184
        %p378 = pneg %p213
        %p379 = pneg %p210
        %s380 = sand.u32 %s200, 1
        %s381 = scalar_lea.sflag [#allocation5], %s380
        %s382 = sand.u32 %s200, 1
        %s383 = smul.addr %s382, 32
        %s384 = scalar_lea.vmem [#allocation12], %s383
        %s385 = smul.u32 4, %s30
        %s386 = ssub.s32 5, %s385
        %p387 = scmp.lt.s32.totalorder %s386, 4
        %s388 = scalar_select %p387, %s386, 4
        %s389 = smul.u32 8, %s388
        %s390 = smul.u32 4, %s30
        %s391 = ssub.s32 5, %s390
        %p392 = scmp.lt.s32.totalorder %s391, 4
        %s393 = scalar_select %p392, %s391, 4
        %s394 = smul.u32 8, %s393
        %p395 = scmp.eq.s32.totalorder %s31, 0
        // Predicated region
        $region69: #{tpu_custom_call.1} parent=47 // pred_check
          %p396 = pneg %p395
        $region70: #{tpu_custom_call.1} parent=47 // pred_check_branch
          %398 = sbr.rel (%p396) target = $region72
        $region71: #{tpu_custom_call.1} parent=47 // pred_region
          %399 = vst [vmem:[#allocation2] sm:$0xff] 0.0
          %400 = vst [vmem:[#allocation2 + $0x8] sm:$0xff] 0.0
          %401 = vst [vmem:[#allocation2 + $0x10] sm:$0xff] 0.0
          %402 = vst [vmem:[#allocation2 + $0x18] sm:$0xff] 0.0
          %403 = vst [vmem:[#allocation2 + $0x20] sm:$0xff] 0.0
          %404 = vst [vmem:[#allocation2 + $0x28] sm:$0xff] 0.0
          %405 = vst [vmem:[#allocation2 + $0x30] sm:$0xff] 0.0
          %406 = vst [vmem:[#allocation2 + $0x38] sm:$0xff] 0.0
        $region72: #{tpu_custom_call.1} parent=47 // pred_fallthru
          _
        %v407 = vld [vmem:[#allocation2] sm:$0xff]
        %v408 = vld [vmem:[#allocation2 + $0x8] sm:$0xff]
        %v409 = vld [vmem:[#allocation2 + $0x10] sm:$0xff]
        %v410 = vld [vmem:[#allocation2 + $0x18] sm:$0xff]
        %v411 = vld [vmem:[#allocation2 + $0x20] sm:$0xff]
        %v412 = vld [vmem:[#allocation2 + $0x28] sm:$0xff]
        %v413 = vld [vmem:[#allocation2 + $0x30] sm:$0xff]
        %v414 = vld [vmem:[#allocation2 + $0x38] sm:$0xff]
        %v415 = vld [vmem:[%s333] sm:$0xff]
        %v416 = vld [vmem:[%s333 + $0x8] sm:$0xff]
        %v417 = vld [vmem:[%s333 + $0x10] sm:$0xff]
        %v418 = vld [vmem:[%s333 + $0x18] sm:$0xff]
        %v419 = vpack.c.bf16 %v416, %v415
        %v420 = vpack.c.bf16 %v418, %v417
        %v421 = vld [vmem:[#allocation6] sm:$0xff]
        %v422 = vld [vmem:[#allocation6 + $0x8] sm:$0xff]
        %v423 = vld [vmem:[#allocation6 + $0x10] sm:$0xff]
        %v424 = vld [vmem:[#allocation6 + $0x18] sm:$0xff]
        %v425 = vld [vmem:[#allocation6 + $0x20] sm:$0xff]
        %v426 = vld [vmem:[#allocation6 + $0x28] sm:$0xff]
        %v427 = vld [vmem:[#allocation6 + $0x30] sm:$0xff]
        %v428 = vld [vmem:[#allocation6 + $0x38] sm:$0xff]
        %v429 = vld [vmem:[#allocation6 + $0x40] sm:$0xff]
        %v430 = vld [vmem:[#allocation6 + $0x48] sm:$0xff]
        %v431 = vld [vmem:[#allocation6 + $0x50] sm:$0xff]
        %v432 = vld [vmem:[#allocation6 + $0x58] sm:$0xff]
        %v433 = vld [vmem:[#allocation6 + $0x60] sm:$0xff]
        %v434 = vld [vmem:[#allocation6 + $0x68] sm:$0xff]
        %v435 = vld [vmem:[#allocation6 + $0x70] sm:$0xff]
        %v436 = vld [vmem:[#allocation6 + $0x78] sm:$0xff]
        %v453 = vunpack.c.l.b16 %v421
        %v454 = vunpack.c.h.b16 %v421
        %v455 = vunpack.c.l.b16 %v422
        %v456 = vunpack.c.h.b16 %v422
        %v457 = vunpack.c.l.b16 %v423
        %v458 = vunpack.c.h.b16 %v423
        %v459 = vunpack.c.l.b16 %v424
        %v460 = vunpack.c.h.b16 %v424
        %v461 = vunpack.c.l.b16 %v425
        %v462 = vunpack.c.h.b16 %v425
        %v463 = vunpack.c.l.b16 %v426
        %v464 = vunpack.c.h.b16 %v426
        %v465 = vunpack.c.l.b16 %v427
        %v466 = vunpack.c.h.b16 %v427
        %v467 = vunpack.c.l.b16 %v428
        %v468 = vunpack.c.h.b16 %v428
        %v469 = vunpack.c.l.b16 %v429
        %v470 = vunpack.c.h.b16 %v429
        %v471 = vunpack.c.l.b16 %v430
        %v472 = vunpack.c.h.b16 %v430
        %v473 = vunpack.c.l.b16 %v431
        %v474 = vunpack.c.h.b16 %v431
        %v475 = vunpack.c.l.b16 %v432
        %v476 = vunpack.c.h.b16 %v432
        %v477 = vunpack.c.l.b16 %v433
        %v478 = vunpack.c.h.b16 %v433
        %v479 = vunpack.c.l.b16 %v434
        %v480 = vunpack.c.h.b16 %v434
        %v481 = vunpack.c.l.b16 %v435
        %v482 = vunpack.c.h.b16 %v435
        %v483 = vunpack.c.l.b16 %v436
        %v484 = vunpack.c.h.b16 %v436
        %v485 = vpack.c.b16 %v455, %v453
        %v486 = vpack.c.b16 %v456, %v454
        %v487 = vpack.c.b16 %v459, %v457
        %v488 = vpack.c.b16 %v460, %v458
        %v489 = vpack.c.b16 %v463, %v461
        %v490 = vpack.c.b16 %v464, %v462
        %v491 = vpack.c.b16 %v467, %v465
        %v492 = vpack.c.b16 %v468, %v466
        %v493 = vpack.c.b16 %v471, %v469
        %v494 = vpack.c.b16 %v472, %v470
        %v495 = vpack.c.b16 %v475, %v473
        %v496 = vpack.c.b16 %v476, %v474
        %v497 = vpack.c.b16 %v479, %v477
        %v498 = vpack.c.b16 %v480, %v478
        %v499 = vpack.c.b16 %v483, %v481
        %v500 = vpack.c.b16 %v484, %v482
        %517 = vmatpush.bf16.msra.mxu0 %v499
        %518 = vmatpush.bf16.msra.mxu0 %v497
        %519 = vmatpush.bf16.msra.mxu0 %v495
        %520 = vmatpush.bf16.msra.mxu0 %v493
        %521 = vmatpush.bf16.msra.mxu0 %v491
        %522 = vmatpush.bf16.msra.mxu0 %v489
        %523 = vmatpush.bf16.msra.mxu0 %v487
        %524 = vmatpush.bf16.msra.mxu0 %v485
        %525 = vmatmul.bf16.gmra.mxu0 %v419
        %v526 = vpop.f32.mrf.mxu0
        %v527 = vadd.f32 0.0, %v526
        %v528 = vpop.f32.mrf.mxu0
        %v529 = vadd.f32 0.0, %v528
        %530 = vmatmul.bf16.gmra.mxu0 %v420
        %v531 = vpop.f32.mrf.mxu0
        %v532 = vadd.f32 0.0, %v531
        %v533 = vpop.f32.mrf.mxu0
        %v534 = vadd.f32 0.0, %v533
        %535 = vdwg.mxu0
        %536 = vmatpush.bf16.msra.mxu0 %v500
        %537 = vmatpush.bf16.msra.mxu0 %v498
        %538 = vmatpush.bf16.msra.mxu0 %v496
        %539 = vmatpush.bf16.msra.mxu0 %v494
        %540 = vmatpush.bf16.msra.mxu0 %v492
        %541 = vmatpush.bf16.msra.mxu0 %v490
        %542 = vmatpush.bf16.msra.mxu0 %v488
        %543 = vmatpush.bf16.msra.mxu0 %v486
        %544 = vmatmul.bf16.gmra.mxu0 %v419
        %v545 = vpop.f32.mrf.mxu0
        %v546 = vadd.f32 0.0, %v545
        %v547 = vpop.f32.mrf.mxu0
        %v548 = vadd.f32 0.0, %v547
        %549 = vmatmul.bf16.gmra.mxu0 %v420
        %v550 = vpop.f32.mrf.mxu0
        %v551 = vadd.f32 0.0, %v550
        %v552 = vpop.f32.mrf.mxu0
        %v553 = vadd.f32 0.0, %v552
        %554 = vdwg.mxu0
        %v555 = vadd.f32 %v407, %v527
        %v556 = vadd.f32 %v408, %v546
        %v557 = vadd.f32 %v409, %v529
        %v558 = vadd.f32 %v410, %v548
        %v559 = vadd.f32 %v411, %v532
        %v560 = vadd.f32 %v412, %v551
        %v561 = vadd.f32 %v413, %v534
        %v562 = vadd.f32 %v414, %v553
        %563 = vst [vmem:[#allocation2] sm:$0xff] %v555
        %564 = vst [vmem:[#allocation2 + $0x8] sm:$0xff] %v556
        %565 = vst [vmem:[#allocation2 + $0x10] sm:$0xff] %v557
        %566 = vst [vmem:[#allocation2 + $0x18] sm:$0xff] %v558
        %567 = vst [vmem:[#allocation2 + $0x20] sm:$0xff] %v559
        %568 = vst [vmem:[#allocation2 + $0x28] sm:$0xff] %v560
        %569 = vst [vmem:[#allocation2 + $0x30] sm:$0xff] %v561
        %570 = vst [vmem:[#allocation2 + $0x38] sm:$0xff] %v562
        // Predicated region
        $region73: #{tpu_custom_call.1} parent=47 // pred_check
          %p571 = pneg %p395
        $region74: #{tpu_custom_call.1} parent=47 // pred_check_branch
          %573 = sbr.rel (%p571) target = $region76
        $region75: #{tpu_custom_call.1} parent=47 // pred_region
          %v574 = vld [vmem:[#allocation2] sm:$0xff]
          %v575 = vld [vmem:[#allocation2 + $0x8] sm:$0xff]
          %v576 = vld [vmem:[#allocation2 + $0x10] sm:$0xff]
          %v577 = vld [vmem:[#allocation2 + $0x18] sm:$0xff]
          %v578 = vld [vmem:[#allocation2 + $0x20] sm:$0xff]
          %v579 = vld [vmem:[#allocation2 + $0x28] sm:$0xff]
          %v580 = vld [vmem:[#allocation2 + $0x30] sm:$0xff]
          %v581 = vld [vmem:[#allocation2 + $0x38] sm:$0xff]
          %v582 = vld [vmem:[#allocation8] sm:$0x3]
          %v584 = vperm.slane %v582, 0
          %v585 = vperm.slane %v582, 1
          %v588 = vadd.f32 %v574, %v584
          %v589 = vadd.f32 %v575, %v585
          %v590 = vadd.f32 %v576, %v584
          %v591 = vadd.f32 %v577, %v585
          %v592 = vadd.f32 %v578, %v584
          %v593 = vadd.f32 %v579, %v585
          %v594 = vadd.f32 %v580, %v584
          %v595 = vadd.f32 %v581, %v585
          %v596 = vmax.f32 %v588, 0.0
          %v597 = vmax.f32 %v589, 0.0
          %v598 = vmax.f32 %v590, 0.0
          %v599 = vmax.f32 %v591, 0.0
          %v600 = vmax.f32 %v592, 0.0
          %v601 = vmax.f32 %v593, 0.0
          %v602 = vmax.f32 %v594, 0.0
          %v603 = vmax.f32 %v595, 0.0
          %v604 = vpack.c.bf16 %v598, %v596
          %v605 = vpack.c.bf16 %v599, %v597
          %v606 = vpack.c.bf16 %v602, %v600
          %v607 = vpack.c.bf16 %v603, %v601
          %v608 = vld [vmem:[#allocation9] sm:$0xf]
          %v609 = vld [vmem:[#allocation9 + $0x4] sm:$0xf]
          %v610 = vld [vmem:[#allocation9 + $0x8] sm:$0xf]
          %v611 = vld [vmem:[#allocation9 + $0xc] sm:$0xf]
          %v612 = vld [vmem:[#allocation9 + $0x10] sm:$0xf]
          %v613 = vld [vmem:[#allocation9 + $0x14] sm:$0xf]
          %v614 = vld [vmem:[#allocation9 + $0x18] sm:$0xf]
          %v615 = vld [vmem:[#allocation9 + $0x1c] sm:$0xf]
          %v616 = vld [vmem:[#allocation9 + $0x20] sm:$0xf]
          %v617 = vld [vmem:[#allocation9 + $0x24] sm:$0xf]
          %v618 = vld [vmem:[#allocation9 + $0x28] sm:$0xf]
          %v619 = vld [vmem:[#allocation9 + $0x2c] sm:$0xf]
          %v620 = vld [vmem:[#allocation9 + $0x30] sm:$0xf]
          %v621 = vld [vmem:[#allocation9 + $0x34] sm:$0xf]
          %v622 = vld [vmem:[#allocation9 + $0x38] sm:$0xf]
          %v623 = vld [vmem:[#allocation9 + $0x3c] sm:$0xf]
          %v624 = vld [vmem:[#allocation9 + $0x40] sm:$0xf]
          %v625 = vld [vmem:[#allocation9 + $0x44] sm:$0xf]
          %v626 = vld [vmem:[#allocation9 + $0x48] sm:$0xf]
          %v627 = vld [vmem:[#allocation9 + $0x4c] sm:$0xf]
          %v628 = vld [vmem:[#allocation9 + $0x50] sm:$0xf]
          %v629 = vld [vmem:[#allocation9 + $0x54] sm:$0xf]
          %v630 = vld [vmem:[#allocation9 + $0x58] sm:$0xf]
          %v631 = vld [vmem:[#allocation9 + $0x5c] sm:$0xf]
          %v632 = vld [vmem:[#allocation9 + $0x60] sm:$0xf]
          %v633 = vld [vmem:[#allocation9 + $0x64] sm:$0xf]
          %v634 = vld [vmem:[#allocation9 + $0x68] sm:$0xf]
          %v635 = vld [vmem:[#allocation9 + $0x6c] sm:$0xf]
          %v636 = vld [vmem:[#allocation9 + $0x70] sm:$0xf]
          %v637 = vld [vmem:[#allocation9 + $0x74] sm:$0xf]
          %v638 = vld [vmem:[#allocation9 + $0x78] sm:$0xf]
          %v639 = vld [vmem:[#allocation9 + $0x7c] sm:$0xf]
          %v640 = vld [vmem:[%s4] sm:$0x1]
          %v642 = vperm.slane %v640, 0
          %v676 = vunpack.c.l.b16 %v608
          %v677 = vunpack.c.l.b16 %v609
          %v678 = vunpack.c.l.b16 %v610
          %v679 = vunpack.c.l.b16 %v611
          %v680 = vunpack.c.l.b16 %v612
          %v681 = vunpack.c.l.b16 %v613
          %v682 = vunpack.c.l.b16 %v614
          %v683 = vunpack.c.l.b16 %v615
          %v684 = vunpack.c.l.b16 %v616
          %v685 = vunpack.c.l.b16 %v617
          %v686 = vunpack.c.l.b16 %v618
          %v687 = vunpack.c.l.b16 %v619
          %v688 = vunpack.c.l.b16 %v620
          %v689 = vunpack.c.l.b16 %v621
          %v690 = vunpack.c.l.b16 %v622
          %v691 = vunpack.c.l.b16 %v623
          %v692 = vunpack.c.l.b16 %v624
          %v693 = vunpack.c.l.b16 %v625
          %v694 = vunpack.c.l.b16 %v626
          %v695 = vunpack.c.l.b16 %v627
          %v696 = vunpack.c.l.b16 %v628
          %v697 = vunpack.c.l.b16 %v629
          %v698 = vunpack.c.l.b16 %v630
          %v699 = vunpack.c.l.b16 %v631
          %v700 = vunpack.c.l.b16 %v632
          %v701 = vunpack.c.l.b16 %v633
          %v702 = vunpack.c.l.b16 %v634
          %v703 = vunpack.c.l.b16 %v635
          %v704 = vunpack.c.l.b16 %v636
          %v705 = vunpack.c.l.b16 %v637
          %v706 = vunpack.c.l.b16 %v638
          %v707 = vunpack.c.l.b16 %v639
          %v708 = vpack.c.b16 %v677, %v676
          %v709 = vpack.c.b16 %v679, %v678
          %v710 = vpack.c.b16 %v681, %v680
          %v711 = vpack.c.b16 %v683, %v682
          %v712 = vpack.c.b16 %v685, %v684
          %v713 = vpack.c.b16 %v687, %v686
          %v714 = vpack.c.b16 %v689, %v688
          %v715 = vpack.c.b16 %v691, %v690
          %v716 = vpack.c.b16 %v693, %v692
          %v717 = vpack.c.b16 %v695, %v694
          %v718 = vpack.c.b16 %v697, %v696
          %v719 = vpack.c.b16 %v699, %v698
          %v720 = vpack.c.b16 %v701, %v700
          %v721 = vpack.c.b16 %v703, %v702
          %v722 = vpack.c.b16 %v705, %v704
          %v723 = vpack.c.b16 %v707, %v706
          %740 = vmatpush.bf16.msra.mxu0 %v715
          %741 = vmatpush.bf16.msra.mxu0 %v714
          %742 = vmatpush.bf16.msra.mxu0 %v713
          %743 = vmatpush.bf16.msra.mxu0 %v712
          %744 = vmatpush.bf16.msra.mxu0 %v711
          %745 = vmatpush.bf16.msra.mxu0 %v710
          %746 = vmatpush.bf16.msra.mxu0 %v709
          %747 = vmatpush.bf16.msra.mxu0 %v708
          %748 = vmatmul.bf16.gmra.mxu0 %v604
          %v749 = vpop.f32.mrf.mxu0
          %v750 = vadd.f32 %v642, %v749
          %v751 = vpop.f32.mrf.mxu0
          %v752 = vadd.f32 %v642, %v751
          %753 = vmatmul.bf16.gmra.mxu0 %v606
          %v754 = vpop.f32.mrf.mxu0
          %v755 = vadd.f32 %v642, %v754
          %v756 = vpop.f32.mrf.mxu0
          %v757 = vadd.f32 %v642, %v756
          %758 = vdwg.mxu0
          %759 = vmatpush.bf16.msra.mxu0 %v723
          %760 = vmatpush.bf16.msra.mxu0 %v722
          %761 = vmatpush.bf16.msra.mxu0 %v721
          %762 = vmatpush.bf16.msra.mxu0 %v720
          %763 = vmatpush.bf16.msra.mxu0 %v719
          %764 = vmatpush.bf16.msra.mxu0 %v718
          %765 = vmatpush.bf16.msra.mxu0 %v717
          %766 = vmatpush.bf16.msra.mxu0 %v716
          %767 = vmatmul.bf16.gmra.mxu0 %v605
          %v768 = vpop.f32.mrf.mxu0
          %v769 = vadd.f32 %v750, %v768
          %v770 = vpop.f32.mrf.mxu0
          %v771 = vadd.f32 %v752, %v770
          %772 = vmatmul.bf16.gmra.mxu0 %v607
          %v773 = vpop.f32.mrf.mxu0
          %v774 = vadd.f32 %v755, %v773
          %v775 = vpop.f32.mrf.mxu0
          %v776 = vadd.f32 %v757, %v775
          %777 = vdwg.mxu0
          %v778 = vmax.f32 %v769, 0.0
          %v779 = vmax.f32 %v771, 0.0
          %v780 = vmax.f32 %v774, 0.0
          %v781 = vmax.f32 %v776, 0.0
          %v782 = vpack.c.bf16 %v779, %v778
          %v783 = vpack.c.bf16 %v781, %v780
          %v784 = vld [vmem:[#allocation11] sm:$0xf]
          %v785 = vld [vmem:[#allocation11 + $0x4] sm:$0xf]
          %v786 = vld [vmem:[#allocation11 + $0x8] sm:$0xf]
          %v787 = vld [vmem:[#allocation11 + $0xc] sm:$0xf]
          %v788 = vld [vmem:[#allocation11 + $0x10] sm:$0xf]
          %v789 = vld [vmem:[#allocation11 + $0x14] sm:$0xf]
          %v790 = vld [vmem:[#allocation11 + $0x18] sm:$0xf]
          %v791 = vld [vmem:[#allocation11 + $0x1c] sm:$0xf]
          %v792 = vld [vmem:[#allocation11 + $0x20] sm:$0xf]
          %v793 = vld [vmem:[#allocation11 + $0x24] sm:$0xf]
          %v794 = vld [vmem:[#allocation11 + $0x28] sm:$0xf]
          %v795 = vld [vmem:[#allocation11 + $0x2c] sm:$0xf]
          %v796 = vld [vmem:[#allocation11 + $0x30] sm:$0xf]
          %v797 = vld [vmem:[#allocation11 + $0x34] sm:$0xf]
          %v798 = vld [vmem:[#allocation11 + $0x38] sm:$0xf]
          %v799 = vld [vmem:[#allocation11 + $0x3c] sm:$0xf]
          %v800 = vld [vmem:[%s6] sm:$0x1]
          %v802 = vperm.slane %v800, 0
          %v820 = vunpack.c.l.b16 %v784
          %v821 = vunpack.c.l.b16 %v785
          %v822 = vunpack.c.l.b16 %v786
          %v823 = vunpack.c.l.b16 %v787
          %v824 = vunpack.c.l.b16 %v788
          %v825 = vunpack.c.l.b16 %v789
          %v826 = vunpack.c.l.b16 %v790
          %v827 = vunpack.c.l.b16 %v791
          %v828 = vunpack.c.l.b16 %v792
          %v829 = vunpack.c.l.b16 %v793
          %v830 = vunpack.c.l.b16 %v794
          %v831 = vunpack.c.l.b16 %v795
          %v832 = vunpack.c.l.b16 %v796
          %v833 = vunpack.c.l.b16 %v797
          %v834 = vunpack.c.l.b16 %v798
          %v835 = vunpack.c.l.b16 %v799
          %v836 = vpack.c.b16 %v821, %v820
          %v837 = vpack.c.b16 %v823, %v822
          %v838 = vpack.c.b16 %v825, %v824
          %v839 = vpack.c.b16 %v827, %v826
          %v840 = vpack.c.b16 %v829, %v828
          %v841 = vpack.c.b16 %v831, %v830
          %v842 = vpack.c.b16 %v833, %v832
          %v843 = vpack.c.b16 %v835, %v834
          %852 = vmatpush.bf16.msra.mxu0 %v843
          %853 = vmatpush.bf16.msra.mxu0 %v842
          %854 = vmatpush.bf16.msra.mxu0 %v841
          %855 = vmatpush.bf16.msra.mxu0 %v840
          %856 = vmatpush.bf16.msra.mxu0 %v839
          %857 = vmatpush.bf16.msra.mxu0 %v838
          %858 = vmatpush.bf16.msra.mxu0 %v837
          %859 = vmatpush.bf16.msra.mxu0 %v836
          %860 = vmatmul.bf16.gmra.mxu0 %v782
          %v861 = vpop.f32.mrf.mxu0
          %v862 = vadd.f32 %v802, %v861
          %v863 = vpop.f32.mrf.mxu0
          %v864 = vadd.f32 %v802, %v863
          %865 = vmatmul.bf16.gmra.mxu0 %v783
          %v866 = vpop.f32.mrf.mxu0
          %v867 = vadd.f32 %v802, %v866
          %v868 = vpop.f32.mrf.mxu0
          %v869 = vadd.f32 %v802, %v868
          %870 = vdwg.mxu0
          %871 = vst [vmem:[%s384] sm:$0xff] %v862
          %872 = vst [vmem:[%s384 + $0x8] sm:$0xff] %v864
          %873 = vst [vmem:[%s384 + $0x10] sm:$0xff] %v867
          %874 = vst [vmem:[%s384 + $0x18] sm:$0xff] %v869
        $region76: #{tpu_custom_call.1} parent=47 // pred_fallthru
          _
        %s875 = sand.u32 %s200, 1
        %s876 = scalar_lea.sflag [#allocation5], %s875
        %s877 = sand.u32 %s200, 1
        %s878 = smul.addr %s877, 32
        %s879 = scalar_lea.vmem [#allocation12], %s878
        // Predicated region
        $region77: #{tpu_custom_call.1} parent=47 // pred_check
          %p880 = pneg %p210
        $region78: #{tpu_custom_call.1} parent=47 // pred_check_branch
          %882 = sbr.rel (%p880) target = $region80
        $region79: #{tpu_custom_call.1} parent=47 // pred_region
          %s883 = smul.u32 4, %s30
          %s884 = ssub.s32 5, %s883
          %p885 = scmp.lt.s32.totalorder %s884, 4
          %s886 = scalar_select %p885, %s884, 4
          %s887 = smul.u32 8, %s886
          %s888 = ssub.s32 32, %s887
          %s889 = sshll.u32 %s888, 4
          %890 = vsyncadd %s876, %s889
          %p891 = scmp.ne.s32.totalorder 0, %s887
          %s892 = smul.addr %s883, 8
          %s893 = scalar_lea.hbm %s7, %s892
          %s894 = smul.u32 8, %s886
          %s895 = sshll.u32 %s879, 4
          %s896 = int_to_ptr.vmem [resolvable:$true] %s895
          %s897 = sshll.u32 %s893, 4
          %s898 = int_to_ptr.hbm [resolvable:$true] %s897
          %s899 = sshll.u32 %s894, 4
          %903 = dma.vmem_to_hbm [thread:$0]  (%p891), %s896, %s899, %s898, %s876, 128, 128, 8
        $region80: #{tpu_custom_call.1} parent=47 // pred_fallthru
          _
      $region48: #{tpu_custom_call.1} parent=5 // pred_fallthru
        _
      %p904 = scmp.le.s32.totalorder 2, %s21
      // Predicated region
      $region81: #{tpu_custom_call.1} parent=5 // pred_check
        %p905 = pneg %p904
      $region82: #{tpu_custom_call.1} parent=5 // pred_check_branch
        %907 = sbr.rel (%p905) target = $region84
      $region83: #{tpu_custom_call.1} parent=5 // pred_region
        %s908 = ssub.s32 %s21, 2
        // Predicated region
        $region85: #{tpu_custom_call.1} parent=83 // pred_check
          %p909 = pneg %p216
        $region86: #{tpu_custom_call.1} parent=83 // pred_check_branch
          %911 = sbr.rel (%p909) target = $region88
        $region87: #{tpu_custom_call.1} parent=83 // pred_region
          %s912 = sand.u32 %s201, 1
          %s913 = scalar_lea.sflag [#allocation5], %s912
          %s914 = sand.u32 %s201, 1
          %s915 = smul.addr %s914, 32
          %s916 = scalar_lea.vmem [#allocation12], %s915
          %918 = dma.done %s913, 512
        $region88: #{tpu_custom_call.1} parent=83 // pred_fallthru
          _
      $region84: #{tpu_custom_call.1} parent=5 // pred_fallthru
        _
    $region6: #{tpu_custom_call.1} parent=1 // loop_footer
      %s25 = sadd.s32 1, %s21
    $region7: #{tpu_custom_call.1} parent=1 // loop_footer_branch
      %20 = sbr.rel target = $region3
    $region8: #{tpu_custom_call.1} parent=1 // loop_exit
      _
    %919 = vsyncpa [#allocation4], 1
    %s920 = scalar_lea.sflag [#allocation4], 1
    %921 = vsyncpa %s920, 1
    %922 = vsyncpa [#allocation7], 1
    %923 = vsyncpa [#allocation10], 1
    %924 = vsyncpa [#allocation5], 1
    %s925 = scalar_lea.sflag [#allocation5], 1
    %926 = vsyncpa %s925, 1

</llo_original>
